<compile_context>
chip_gen: v7x
topology: tpu7x:2x2x1
jax: 0.10.0
libtpu: 0.0.40
codegen_flags: <defaults>
</compile_context>

<pallas_src>
import functools
import math

import jax
import jax.numpy as jnp
from jax.experimental import pallas as pl
from jax.experimental.pallas import tpu as pltpu


def encoder_kernel(x_ref,       # (B*L, E_pad) f32   activations, padded lanes zero
                   keep_ref,    # (B*L, E_pad) f32   1.0 keep / 0.0 masked (per batch)
                   bmask_ref,   # (B*L, B*L)   f32   0 within batch, -1e9 across batches
                   wqkv_ref,    # (Ln, E_pad, E) bf16  block-diagonal per-head projection
                   wout_ref,    # (Ln, E, E_pad) bf16  OutputLiner (zero-padded columns)
                   gamma_ref,   # (Ln, 1, E_pad) f32   LayerNorm gamma (zero in pad lanes)
                   beta_ref,    # (Ln, 1, E_pad) f32   LayerNorm beta  (zero in pad lanes)
                   out_ref,     # (B*L, E_pad) f32
                   *, layer_num, head_num, head_dim, emb, scale):
    f32, bf16 = jnp.float32, jnp.bfloat16
    rows, e_pad = x_ref.shape

    x = x_ref[...]          # [BL, E_pad] f32
    keep = keep_ref[...]    # [BL, E_pad] f32
    bmask = bmask_ref[...]  # [BL, BL]    f32

    # Lane mask for LayerNorm statistics over the real E lanes only (hoisted).
    lane_ids = jax.lax.broadcasted_iota(jnp.int32, (1, e_pad), 1)
    lane_mask = (lane_ids < emb).astype(f32)
    inv_e = f32(1.0 / emb)

    # TODO(synk): switch this static Python layer loop to lax.fori_loop with dynamic
    # ref indexing if layer_num grows (unrolling many layers blows up vreg pressure).
    for l in range(layer_num):
        w_qkv = wqkv_ref[l]   # [E_pad, E] bf16
        w_out = wout_ref[l]   # [E, E_pad] bf16
        gamma = gamma_ref[l]  # [1, E_pad] f32
        beta = beta_ref[l]    # [1, E_pad] f32

        # Fused per-head QKV projection (Q == K == V in the reference): one MXU matmul.
        qkv = jnp.dot(x.astype(bf16), w_qkv, preferred_element_type=f32)    # [BL, E]

        # One head-major retile (reshape + transpose) instead of H lane-slices + stack.
        qkv_h = jnp.transpose(qkv.reshape(rows, head_num, head_dim), (1, 0, 2))  # [H, BL, Eh]
        qkv_h_bf = qkv_h.astype(bf16)

        # Head-batched attention.  The additive cross-batch mask keeps batches
        # independent while sharing one score matrix: exp(-1e9 - max) == 0.0 in f32,
        # so cross-batch keys contribute exactly nothing.
        scores = jnp.einsum('hqd,hkd->hqk', qkv_h_bf, qkv_h_bf,
                            preferred_element_type=f32) * scale + bmask     # [H, BL, BL]
        # TODO(synk): reference `Softmax` helper is broken (returns the nn.Softmax
        # constructor with Dimension=0); the intended stable softmax over keys is used.
        m = jnp.max(scores, axis=-1, keepdims=True)
        e = jnp.exp(scores - m)
        denom = jnp.sum(e, axis=-1, keepdims=True)
        probs = e * pl.reciprocal(denom, approx=True)   # EUP reciprocal (inference-grade)

        att = jnp.einsum('hqk,hkd->hqd', probs.astype(bf16), qkv_h_bf,
                         preferred_element_type=f32)                        # [H, BL, Eh]

        # Merge heads and apply OutputLiner as a single [BL,E] x [E,E_pad] matmul.
        # TODO(synk): reference reshapes to [-1, L, HeadEmbeddingLength] before the
        # [E,E] OutputLiner matmul (shape-inconsistent); the intended [-1, L, E] is used.
        att_m = jnp.transpose(att, (1, 0, 2)).reshape(rows, emb)            # [BL, E]
        mha = jnp.dot(att_m.astype(bf16), w_out, preferred_element_type=f32)  # [BL, E_pad]

        # SrcMask (per-batch flag): VerticalMask(-1e9) + softmax + HorizontalMask(0)
        # is exactly "zero the attention output for masked batches".
        # (A lax.cond skip of the whole attention block is only worthwhile if the
        # batch stays a grid axis; it is collapsed here.)
        mha = mha * keep

        # Residual + LayerNorm (torch defaults: eps=1e-5, biased variance) over the
        # real E lanes.  Padded lanes stay exactly zero (lane-masked diff + zero
        # gamma/beta), so the dead FFN / second-LayerNorm branch is simply absent.
        y = mha + x
        mean = jnp.sum(y, axis=-1, keepdims=True) * inv_e
        diff = (y - mean) * lane_mask
        var = jnp.sum(diff * diff, axis=-1, keepdims=True) * inv_e
        x = diff * jax.lax.rsqrt(var + 1e-5) * gamma + beta

    out_ref[...] = x


def _block_diag_padded(head_w, e_pad):
    """(H, Eh, Eh) per-head weights -> block-diagonal (E_pad, E) projection."""
    H, Eh, _ = head_w.shape
    E = H * Eh
    w = jnp.zeros((e_pad, E), jnp.float32)
    for h in range(H):
        w = w.at[h * Eh:(h + 1) * Eh, h * Eh:(h + 1) * Eh].set(head_w[h])
    return w


def encoder_forward(x, src_mask, layer_params):
    B, L, E = x.shape
    H, Eh, _ = layer_params[0]["head_linear"].shape
    Ln = len(layer_params)
    BL = B * L
    e_pad = max(128, ((E + 127) // 128) * 128)   # lane-dense activations / output

    # ---- host-side packing (tiny; done once per call) --------------------------------
    x_pad = jnp.zeros((BL, e_pad), jnp.float32).at[:, :E].set(x.reshape(BL, E))

    keep = jnp.broadcast_to((1.0 - src_mask.astype(jnp.float32))[:, None, None],
                            (B, L, e_pad)).reshape(BL, e_pad)

    batch_id = jnp.arange(BL, dtype=jnp.int32) // L
    bmask = jnp.where(batch_id[:, None] == batch_id[None, :],
                      jnp.float32(0.0), jnp.float32(-1e9))

    wqkv = jnp.stack([_block_diag_padded(p["head_linear"], e_pad)
                      for p in layer_params]).astype(jnp.bfloat16)          # (Ln, E_pad, E)
    wout = jnp.stack([jnp.zeros((E, e_pad), jnp.float32).at[:, :E].set(p["w_out"])
                      for p in layer_params]).astype(jnp.bfloat16)          # (Ln, E, E_pad)
    gamma = jnp.stack([jnp.zeros((1, e_pad), jnp.float32).at[:, :E].set(p["gamma"])
                       for p in layer_params])                              # (Ln, 1, E_pad)
    beta = jnp.stack([jnp.zeros((1, e_pad), jnp.float32).at[:, :E].set(p["beta"])
                      for p in layer_params])                               # (Ln, 1, E_pad)

    kernel = functools.partial(encoder_kernel, layer_num=Ln, head_num=H,
                               head_dim=Eh, emb=E, scale=1.0 / math.sqrt(Eh))

    # Single grid step: at these shapes per-step work << per-step pipeline overhead,
    # and the constant weight blocks are DMA'd exactly once.  (For large B, re-add a
    # batch grid axis marked "parallel" so both v7x TensorCores get work.)
    out_pad = pl.pallas_call(
        kernel,
        out_shape=jax.ShapeDtypeStruct((BL, e_pad), jnp.float32),
        grid=(1,),
        in_specs=[
            pl.BlockSpec((BL, e_pad), lambda i: (0, 0)),        # x (padded, flattened)
            pl.BlockSpec((BL, e_pad), lambda i: (0, 0)),        # keep mask
            pl.BlockSpec((BL, BL), lambda i: (0, 0)),           # cross-batch score mask
            pl.BlockSpec((Ln, e_pad, E), lambda i: (0, 0, 0)),  # block-diag head proj
            pl.BlockSpec((Ln, E, e_pad), lambda i: (0, 0, 0)),  # output projection
            pl.BlockSpec((Ln, 1, e_pad), lambda i: (0, 0, 0)),  # LayerNorm gamma
            pl.BlockSpec((Ln, 1, e_pad), lambda i: (0, 0, 0)),  # LayerNorm beta
        ],
        out_specs=pl.BlockSpec((BL, e_pad), lambda i: (0, 0)),
        compiler_params=pltpu.CompilerParams(dimension_semantics=("arbitrary",)),
    )(x_pad, keep, bmask, wqkv, wout, gamma, beta)

    return out_pad[:, :E].reshape(B, L, E)


def init_encoder_params(key, head_num, embedding_length, layer_num):
    head_dim = embedding_length // head_num
    inv_sqrt_e = 1.0 / math.sqrt(embedding_length)
    inv_sqrt_eh = 1.0 / math.sqrt(head_dim)
    params = []
    for i in range(layer_num):
        ks = jax.random.split(jax.random.fold_in(key, i), 2)
        params.append({
            "head_linear": jax.random.normal(
                ks[0], (head_num, head_dim, head_dim), jnp.float32) * inv_sqrt_eh,
            "w_out": jax.random.normal(
                ks[1], (embedding_length, embedding_length), jnp.float32) * inv_sqrt_e,
            "gamma": jnp.ones((1, embedding_length), jnp.float32),  # nn.LayerNorm default
            "beta": jnp.zeros((1, embedding_length), jnp.float32),
            # FFN weights (m0/b0/m1/b1) omitted: the reference computes the FFN and a
            # second LayerNorm but discards the result, so they never affect the output.
        })
    return params


if __name__ == "__main__":
    HeadNum, EmbeddingLength, MaxLength, LayerNum = 4, 32, 8, 2
    Batch = 2

    key = jax.random.PRNGKey(0)
    xkey, pkey = jax.random.split(key)

    x = jax.random.normal(xkey, (Batch, MaxLength, EmbeddingLength), jnp.float32)
    # SrcMask in the reference is boolean with trailing dims (1, 1): one flag per batch.
    src_mask = jnp.array([0, 1], dtype=jnp.int32)   # batch 1 fully masked

    layer_params = init_encoder_params(pkey, HeadNum, EmbeddingLength, LayerNum)

    out = encoder_forward(x, src_mask, layer_params)
    jax.block_until_ready(out)
    assert out.shape == (Batch, MaxLength, EmbeddingLength)
    print("KERNEL_OK")
</pallas_src>

<mosaic_0001>
module attributes {stable_mosaic.version = 11 : i64} {
  func.func @encoder_kernel(%arg0: i32, %arg1: memref<16x128xf32, #tpu.memory_space<vmem>>, %arg2: memref<16x128xf32, #tpu.memory_space<vmem>>, %arg3: memref<16x16xf32, #tpu.memory_space<vmem>>, %arg4: memref<2x128x32xbf16, #tpu.memory_space<vmem>>, %arg5: memref<2x32x128xbf16, #tpu.memory_space<vmem>>, %arg6: memref<2x1x128xf32, #tpu.memory_space<vmem>>, %arg7: memref<2x1x128xf32, #tpu.memory_space<vmem>>, %arg8: memref<16x128xf32, #tpu.memory_space<vmem>>) attributes {dimension_semantics = [#tpu.dimension_semantics<arbitrary>], iteration_bounds = array<i64: 1>, scalar_prefetch = 0 : i64, scratch_operands = 0 : i64, tpu.core_type = #tpu.core_type<tc>, window_params = [{pipeline_mode = #tpu.pipeline_mode<synchronous>, transform_indices = @transform_0, window_bounds = array<i64: 16, 128>}, {pipeline_mode = #tpu.pipeline_mode<synchronous>, transform_indices = @transform_1, window_bounds = array<i64: 16, 128>}, {pipeline_mode = #tpu.pipeline_mode<synchronous>, transform_indices = @transform_2, window_bounds = array<i64: 16, 16>}, {pipeline_mode = #tpu.pipeline_mode<synchronous>, transform_indices = @transform_3, window_bounds = array<i64: 2, 128, 32>}, {pipeline_mode = #tpu.pipeline_mode<synchronous>, transform_indices = @transform_4, window_bounds = array<i64: 2, 32, 128>}, {pipeline_mode = #tpu.pipeline_mode<synchronous>, transform_indices = @transform_5, window_bounds = array<i64: 2, 1, 128>}, {pipeline_mode = #tpu.pipeline_mode<synchronous>, transform_indices = @transform_6, window_bounds = array<i64: 2, 1, 128>}, {pipeline_mode = #tpu.pipeline_mode<synchronous>, transform_indices = @transform_7, window_bounds = array<i64: 16, 128>}]} {
    %c0 = arith.constant 0 : index
    %c0_0 = arith.constant 0 : index
    %0 = vector.load %arg1[%c0, %c0_0] : memref<16x128xf32, #tpu.memory_space<vmem>>, vector<16x128xf32>
    %c0_1 = arith.constant 0 : index
    %c0_2 = arith.constant 0 : index
    %1 = vector.load %arg2[%c0_1, %c0_2] : memref<16x128xf32, #tpu.memory_space<vmem>>, vector<16x128xf32>
    %c0_3 = arith.constant 0 : index
    %c0_4 = arith.constant 0 : index
    %2 = vector.load %arg3[%c0_3, %c0_4] : memref<16x16xf32, #tpu.memory_space<vmem>>, vector<16x16xf32>
    %3 = tpu.iota {dimensions = array<i32: 1>} : vector<1x128xi32>
    %c32_i32 = arith.constant 32 : i32
    %4 = vector.broadcast %c32_i32 : i32 to vector<1x128xi32>
    %5 = arith.cmpi slt, %3, %4 : vector<1x128xi32>
    %6 = arith.extui %5 : vector<1x128xi1> to vector<1x128xi32>
    %7 = arith.sitofp %6 : vector<1x128xi32> to vector<1x128xf32>
    %c0_5 = arith.constant 0 : index
    %c0_6 = arith.constant 0 : index
    %c0_7 = arith.constant 0 : index
    %8 = vector.load %arg4[%c0_5, %c0_6, %c0_7] : memref<2x128x32xbf16, #tpu.memory_space<vmem>>, vector<1x128x32xbf16>
    %9 = vector.shape_cast %8 : vector<1x128x32xbf16> to vector<128x32xbf16>
    %c0_8 = arith.constant 0 : index
    %c0_9 = arith.constant 0 : index
    %c0_10 = arith.constant 0 : index
    %10 = vector.load %arg5[%c0_8, %c0_9, %c0_10] : memref<2x32x128xbf16, #tpu.memory_space<vmem>>, vector<1x32x128xbf16>
    %11 = vector.shape_cast %10 : vector<1x32x128xbf16> to vector<32x128xbf16>
    %c0_11 = arith.constant 0 : index
    %c0_12 = arith.constant 0 : index
    %c0_13 = arith.constant 0 : index
    %12 = vector.load %arg6[%c0_11, %c0_12, %c0_13] : memref<2x1x128xf32, #tpu.memory_space<vmem>>, vector<1x1x128xf32>
    %13 = vector.shape_cast %12 : vector<1x1x128xf32> to vector<1x128xf32>
    %c0_14 = arith.constant 0 : index
    %c0_15 = arith.constant 0 : index
    %c0_16 = arith.constant 0 : index
    %14 = vector.load %arg7[%c0_14, %c0_15, %c0_16] : memref<2x1x128xf32, #tpu.memory_space<vmem>>, vector<1x1x128xf32>
    %15 = vector.shape_cast %14 : vector<1x1x128xf32> to vector<1x128xf32>
    %16 = arith.truncf %0 : vector<16x128xf32> to vector<16x128xbf16>
    %cst = arith.constant dense<0.000000e+00> : vector<16x32xf32>
    %17 = tpu.matmul %16, %9, %cst {dimension_numbers = #tpu.dot_dimension_numbers<[1], [0], [0], [1], [0, 0, 1, 1], [], []>} : vector<16x128xbf16>, vector<128x32xbf16>, vector<16x32xf32> -> vector<16x32xf32>
    %18 = vector.shape_cast %17 : vector<16x32xf32> to vector<16x4x8xf32>
    %19 = tpu.transpose %18, [1, 0, 2] : vector<16x4x8xf32> -> vector<4x16x8xf32>
    %20 = arith.truncf %19 : vector<4x16x8xf32> to vector<4x16x8xbf16>
    "tpu.trace_start"() <{level = 10 : i32, message = "hqd,hkd->hqk"}> : () -> ()
    %cst_17 = arith.constant dense<0.000000e+00> : vector<4x16x16xf32>
    %21 = tpu.matmul %20, %20, %cst_17 {dimension_numbers = #tpu.dot_dimension_numbers<[2], [2], [1], [1], [0, 0, 0, 1, 1, 1], [0], [0]>} : vector<4x16x8xbf16>, vector<4x16x8xbf16>, vector<4x16x16xf32> -> vector<4x16x16xf32>
    "tpu.trace_stop"() : () -> ()
    %cst_18 = arith.constant 0.353553385 : f32
    %22 = vector.broadcast %cst_18 : f32 to vector<4x16x16xf32>
    %23 = arith.mulf %21, %22 : vector<4x16x16xf32>
    %24 = vector.shape_cast %2 : vector<16x16xf32> to vector<1x16x16xf32>
    %25 = vector.broadcast %24 : vector<1x16x16xf32> to vector<4x16x16xf32>
    %26 = arith.addf %23, %25 : vector<4x16x16xf32>
    %cst_19 = arith.constant dense<0xFF800000> : vector<4x16xf32>
    %27 = vector.multi_reduction <maximumf>, %26, %cst_19 [2] : vector<4x16x16xf32> to vector<4x16xf32>
    %28 = vector.shape_cast %27 : vector<4x16xf32> to vector<4x16x1xf32>
    %29 = vector.broadcast %28 : vector<4x16x1xf32> to vector<4x16x16xf32>
    %30 = arith.subf %26, %29 : vector<4x16x16xf32>
    %31 = math.exp %30 : vector<4x16x16xf32>
    %cst_20 = arith.constant dense<0.000000e+00> : vector<4x16xf32>
    %32 = vector.multi_reduction <add>, %31, %cst_20 [2] : vector<4x16x16xf32> to vector<4x16xf32>
    %33 = vector.shape_cast %32 : vector<4x16xf32> to vector<4x16x1xf32>
    %34 = tpu.reciprocal %33 {approx = true} : vector<4x16x1xf32> -> vector<4x16x1xf32>
    %35 = vector.broadcast %34 : vector<4x16x1xf32> to vector<4x16x16xf32>
    %36 = arith.mulf %31, %35 : vector<4x16x16xf32>
    %37 = arith.truncf %36 : vector<4x16x16xf32> to vector<4x16x16xbf16>
    "tpu.trace_start"() <{level = 10 : i32, message = "hqk,hkd->hqd"}> : () -> ()
    %cst_21 = arith.constant dense<0.000000e+00> : vector<4x16x8xf32>
    %38 = tpu.matmul %37, %20, %cst_21 {dimension_numbers = #tpu.dot_dimension_numbers<[2], [1], [1], [2], [0, 0, 0, 1, 1, 2], [0], [0]>} : vector<4x16x16xbf16>, vector<4x16x8xbf16>, vector<4x16x8xf32> -> vector<4x16x8xf32>
    "tpu.trace_stop"() : () -> ()
    %39 = tpu.transpose %38, [1, 0, 2] : vector<4x16x8xf32> -> vector<16x4x8xf32>
    %40 = vector.shape_cast %39 : vector<16x4x8xf32> to vector<16x32xf32>
    %41 = arith.truncf %40 : vector<16x32xf32> to vector<16x32xbf16>
    %cst_22 = arith.constant dense<0.000000e+00> : vector<16x128xf32>
    %42 = tpu.matmul %41, %11, %cst_22 {dimension_numbers = #tpu.dot_dimension_numbers<[1], [0], [0], [1], [0, 0, 1, 1], [], []>} : vector<16x32xbf16>, vector<32x128xbf16>, vector<16x128xf32> -> vector<16x128xf32>
    %43 = arith.mulf %42, %1 : vector<16x128xf32>
    %44 = arith.addf %43, %0 : vector<16x128xf32>
    %cst_23 = arith.constant dense<0.000000e+00> : vector<16xf32>
    %45 = vector.multi_reduction <add>, %44, %cst_23 [1] : vector<16x128xf32> to vector<16xf32>
    %46 = vector.shape_cast %45 : vector<16xf32> to vector<16x1xf32>
    %cst_24 = arith.constant 3.125000e-02 : f32
    %47 = vector.broadcast %cst_24 : f32 to vector<16x1xf32>
    %48 = arith.mulf %46, %47 : vector<16x1xf32>
    %49 = vector.broadcast %48 : vector<16x1xf32> to vector<16x128xf32>
    %50 = arith.subf %44, %49 : vector<16x128xf32>
    %51 = vector.broadcast %7 : vector<1x128xf32> to vector<16x128xf32>
    %52 = arith.mulf %50, %51 : vector<16x128xf32>
    %53 = arith.mulf %52, %52 : vector<16x128xf32>
    %cst_25 = arith.constant dense<0.000000e+00> : vector<16xf32>
    %54 = vector.multi_reduction <add>, %53, %cst_25 [1] : vector<16x128xf32> to vector<16xf32>
    %55 = vector.shape_cast %54 : vector<16xf32> to vector<16x1xf32>
    %cst_26 = arith.constant 3.125000e-02 : f32
    %56 = vector.broadcast %cst_26 : f32 to vector<16x1xf32>
    %57 = arith.mulf %55, %56 : vector<16x1xf32>
    %cst_27 = arith.constant 9.99999974E-6 : f32
    %58 = vector.broadcast %cst_27 : f32 to vector<16x1xf32>
    %59 = arith.addf %57, %58 : vector<16x1xf32>
    %60 = math.rsqrt %59 : vector<16x1xf32>
    %61 = vector.broadcast %60 : vector<16x1xf32> to vector<16x128xf32>
    %62 = arith.mulf %52, %61 : vector<16x128xf32>
    %63 = vector.broadcast %13 : vector<1x128xf32> to vector<16x128xf32>
    %64 = arith.mulf %62, %63 : vector<16x128xf32>
    %65 = vector.broadcast %15 : vector<1x128xf32> to vector<16x128xf32>
    %66 = arith.addf %64, %65 : vector<16x128xf32>
    %c1 = arith.constant 1 : index
    %c0_28 = arith.constant 0 : index
    %c0_29 = arith.constant 0 : index
    %67 = vector.load %arg4[%c1, %c0_28, %c0_29] : memref<2x128x32xbf16, #tpu.memory_space<vmem>>, vector<1x128x32xbf16>
    %68 = vector.shape_cast %67 : vector<1x128x32xbf16> to vector<128x32xbf16>
    %c1_30 = arith.constant 1 : index
    %c0_31 = arith.constant 0 : index
    %c0_32 = arith.constant 0 : index
    %69 = vector.load %arg5[%c1_30, %c0_31, %c0_32] : memref<2x32x128xbf16, #tpu.memory_space<vmem>>, vector<1x32x128xbf16>
    %70 = vector.shape_cast %69 : vector<1x32x128xbf16> to vector<32x128xbf16>
    %c1_33 = arith.constant 1 : index
    %c0_34 = arith.constant 0 : index
    %c0_35 = arith.constant 0 : index
    %71 = vector.load %arg6[%c1_33, %c0_34, %c0_35] : memref<2x1x128xf32, #tpu.memory_space<vmem>>, vector<1x1x128xf32>
    %72 = vector.shape_cast %71 : vector<1x1x128xf32> to vector<1x128xf32>
    %c1_36 = arith.constant 1 : index
    %c0_37 = arith.constant 0 : index
    %c0_38 = arith.constant 0 : index
    %73 = vector.load %arg7[%c1_36, %c0_37, %c0_38] : memref<2x1x128xf32, #tpu.memory_space<vmem>>, vector<1x1x128xf32>
    %74 = vector.shape_cast %73 : vector<1x1x128xf32> to vector<1x128xf32>
    %75 = arith.truncf %66 : vector<16x128xf32> to vector<16x128xbf16>
    %cst_39 = arith.constant dense<0.000000e+00> : vector<16x32xf32>
    %76 = tpu.matmul %75, %68, %cst_39 {dimension_numbers = #tpu.dot_dimension_numbers<[1], [0], [0], [1], [0, 0, 1, 1], [], []>} : vector<16x128xbf16>, vector<128x32xbf16>, vector<16x32xf32> -> vector<16x32xf32>
    %77 = vector.shape_cast %76 : vector<16x32xf32> to vector<16x4x8xf32>
    %78 = tpu.transpose %77, [1, 0, 2] : vector<16x4x8xf32> -> vector<4x16x8xf32>
    %79 = arith.truncf %78 : vector<4x16x8xf32> to vector<4x16x8xbf16>
    "tpu.trace_start"() <{level = 10 : i32, message = "hqd,hkd->hqk"}> : () -> ()
    %cst_40 = arith.constant dense<0.000000e+00> : vector<4x16x16xf32>
    %80 = tpu.matmul %79, %79, %cst_40 {dimension_numbers = #tpu.dot_dimension_numbers<[2], [2], [1], [1], [0, 0, 0, 1, 1, 1], [0], [0]>} : vector<4x16x8xbf16>, vector<4x16x8xbf16>, vector<4x16x16xf32> -> vector<4x16x16xf32>
    "tpu.trace_stop"() : () -> ()
    %cst_41 = arith.constant 0.353553385 : f32
    %81 = vector.broadcast %cst_41 : f32 to vector<4x16x16xf32>
    %82 = arith.mulf %80, %81 : vector<4x16x16xf32>
    %83 = vector.shape_cast %2 : vector<16x16xf32> to vector<1x16x16xf32>
    %84 = vector.broadcast %83 : vector<1x16x16xf32> to vector<4x16x16xf32>
    %85 = arith.addf %82, %84 : vector<4x16x16xf32>
    %cst_42 = arith.constant dense<0xFF800000> : vector<4x16xf32>
    %86 = vector.multi_reduction <maximumf>, %85, %cst_42 [2] : vector<4x16x16xf32> to vector<4x16xf32>
    %87 = vector.shape_cast %86 : vector<4x16xf32> to vector<4x16x1xf32>
    %88 = vector.broadcast %87 : vector<4x16x1xf32> to vector<4x16x16xf32>
    %89 = arith.subf %85, %88 : vector<4x16x16xf32>
    %90 = math.exp %89 : vector<4x16x16xf32>
    %cst_43 = arith.constant dense<0.000000e+00> : vector<4x16xf32>
    %91 = vector.multi_reduction <add>, %90, %cst_43 [2] : vector<4x16x16xf32> to vector<4x16xf32>
    %92 = vector.shape_cast %91 : vector<4x16xf32> to vector<4x16x1xf32>
    %93 = tpu.reciprocal %92 {approx = true} : vector<4x16x1xf32> -> vector<4x16x1xf32>
    %94 = vector.broadcast %93 : vector<4x16x1xf32> to vector<4x16x16xf32>
    %95 = arith.mulf %90, %94 : vector<4x16x16xf32>
    %96 = arith.truncf %95 : vector<4x16x16xf32> to vector<4x16x16xbf16>
    "tpu.trace_start"() <{level = 10 : i32, message = "hqk,hkd->hqd"}> : () -> ()
    %cst_44 = arith.constant dense<0.000000e+00> : vector<4x16x8xf32>
    %97 = tpu.matmul %96, %79, %cst_44 {dimension_numbers = #tpu.dot_dimension_numbers<[2], [1], [1], [2], [0, 0, 0, 1, 1, 2], [0], [0]>} : vector<4x16x16xbf16>, vector<4x16x8xbf16>, vector<4x16x8xf32> -> vector<4x16x8xf32>
    "tpu.trace_stop"() : () -> ()
    %98 = tpu.transpose %97, [1, 0, 2] : vector<4x16x8xf32> -> vector<16x4x8xf32>
    %99 = vector.shape_cast %98 : vector<16x4x8xf32> to vector<16x32xf32>
    %100 = arith.truncf %99 : vector<16x32xf32> to vector<16x32xbf16>
    %cst_45 = arith.constant dense<0.000000e+00> : vector<16x128xf32>
    %101 = tpu.matmul %100, %70, %cst_45 {dimension_numbers = #tpu.dot_dimension_numbers<[1], [0], [0], [1], [0, 0, 1, 1], [], []>} : vector<16x32xbf16>, vector<32x128xbf16>, vector<16x128xf32> -> vector<16x128xf32>
    %102 = arith.mulf %101, %1 : vector<16x128xf32>
    %103 = arith.addf %102, %66 : vector<16x128xf32>
    %cst_46 = arith.constant dense<0.000000e+00> : vector<16xf32>
    %104 = vector.multi_reduction <add>, %103, %cst_46 [1] : vector<16x128xf32> to vector<16xf32>
    %105 = vector.shape_cast %104 : vector<16xf32> to vector<16x1xf32>
    %cst_47 = arith.constant 3.125000e-02 : f32
    %106 = vector.broadcast %cst_47 : f32 to vector<16x1xf32>
    %107 = arith.mulf %105, %106 : vector<16x1xf32>
    %108 = vector.broadcast %107 : vector<16x1xf32> to vector<16x128xf32>
    %109 = arith.subf %103, %108 : vector<16x128xf32>
    %110 = vector.broadcast %7 : vector<1x128xf32> to vector<16x128xf32>
    %111 = arith.mulf %109, %110 : vector<16x128xf32>
    %112 = arith.mulf %111, %111 : vector<16x128xf32>
    %cst_48 = arith.constant dense<0.000000e+00> : vector<16xf32>
    %113 = vector.multi_reduction <add>, %112, %cst_48 [1] : vector<16x128xf32> to vector<16xf32>
    %114 = vector.shape_cast %113 : vector<16xf32> to vector<16x1xf32>
    %cst_49 = arith.constant 3.125000e-02 : f32
    %115 = vector.broadcast %cst_49 : f32 to vector<16x1xf32>
    %116 = arith.mulf %114, %115 : vector<16x1xf32>
    %cst_50 = arith.constant 9.99999974E-6 : f32
    %117 = vector.broadcast %cst_50 : f32 to vector<16x1xf32>
    %118 = arith.addf %116, %117 : vector<16x1xf32>
    %119 = math.rsqrt %118 : vector<16x1xf32>
    %120 = vector.broadcast %119 : vector<16x1xf32> to vector<16x128xf32>
    %121 = arith.mulf %111, %120 : vector<16x128xf32>
    %122 = vector.broadcast %72 : vector<1x128xf32> to vector<16x128xf32>
    %123 = arith.mulf %121, %122 : vector<16x128xf32>
    %124 = vector.broadcast %74 : vector<1x128xf32> to vector<16x128xf32>
    %125 = arith.addf %123, %124 : vector<16x128xf32>
    %c0_51 = arith.constant 0 : index
    %c0_52 = arith.constant 0 : index
    %126 = vector.load %arg8[%c0_51, %c0_52] : memref<16x128xf32, #tpu.memory_space<vmem>>, vector<16x128xf32>
    tpu.vector_store %arg8[%c0_51, %c0_52], %125 {strides = array<i32>} : memref<16x128xf32, #tpu.memory_space<vmem>>, vector<16x128xf32>,
    return
  }
  func.func @transform_0(%arg0: i32) -> (i32, i32) {
    %c0_i32 = arith.constant 0 : i32
    %c0_i32_0 = arith.constant 0 : i32
    %c0_i32_1 = arith.constant 0 : i32
    return %c0_i32, %c0_i32_0 : i32, i32
  }
  func.func @transform_1(%arg0: i32) -> (i32, i32) {
    %c0_i32 = arith.constant 0 : i32
    %c0_i32_0 = arith.constant 0 : i32
    %c0_i32_1 = arith.constant 0 : i32
    return %c0_i32, %c0_i32_0 : i32, i32
  }
  func.func @transform_2(%arg0: i32) -> (i32, i32) {
    %c0_i32 = arith.constant 0 : i32
    %c0_i32_0 = arith.constant 0 : i32
    %c0_i32_1 = arith.constant 0 : i32
    return %c0_i32, %c0_i32_0 : i32, i32
  }
  func.func @transform_3(%arg0: i32) -> (i32, i32, i32) {
    %c0_i32 = arith.constant 0 : i32
    %c0_i32_0 = arith.constant 0 : i32
    %c0_i32_1 = arith.constant 0 : i32
    %c0_i32_2 = arith.constant 0 : i32
    return %c0_i32, %c0_i32_0, %c0_i32_1 : i32, i32, i32
  }
  func.func @transform_4(%arg0: i32) -> (i32, i32, i32) {
    %c0_i32 = arith.constant 0 : i32
    %c0_i32_0 = arith.constant 0 : i32
    %c0_i32_1 = arith.constant 0 : i32
    %c0_i32_2 = arith.constant 0 : i32
    return %c0_i32, %c0_i32_0, %c0_i32_1 : i32, i32, i32
  }
  func.func @transform_5(%arg0: i32) -> (i32, i32, i32) {
    %c0_i32 = arith.constant 0 : i32
    %c0_i32_0 = arith.constant 0 : i32
    %c0_i32_1 = arith.constant 0 : i32
    %c0_i32_2 = arith.constant 0 : i32
    return %c0_i32, %c0_i32_0, %c0_i32_1 : i32, i32, i32
  }
  func.func @transform_6(%arg0: i32) -> (i32, i32, i32) {
    %c0_i32 = arith.constant 0 : i32
    %c0_i32_0 = arith.constant 0 : i32
    %c0_i32_1 = arith.constant 0 : i32
    %c0_i32_2 = arith.constant 0 : i32
    return %c0_i32, %c0_i32_0, %c0_i32_1 : i32, i32, i32
  }
  func.func @transform_7(%arg0: i32) -> (i32, i32) {
    %c0_i32 = arith.constant 0 : i32
    %c0_i32_0 = arith.constant 0 : i32
    %c0_i32_1 = arith.constant 0 : i32
    return %c0_i32, %c0_i32_0 : i32, i32
  }
}

</mosaic_0001>

<llo_original>
// kernel: tpu_custom_call.1
$region0: #{tpu_custom_call.1}
  #allocation0 [shape = 'u32[]', space=smem, size = 0x4, offset = 0x4, fixed_abs, tag = 'smem constant byte address 0x4 - core index']
  #allocation1 [shape = 'u32[144,128]{1,0:T(1,128)}', space=vmem, size = 0x12000, scoped, tag = 'internal scratch']
  %s0 = inlined_call_operand.vmem [shape: f32[16,128], index: 0, kind: input, shape index: {}]
  %s1 = inlined_call_operand.vmem [shape: f32[16,128], index: 1, kind: input, shape index: {}]
  %s2 = inlined_call_operand.vmem [shape: f32[16,16], index: 2, kind: input, shape index: {}]
  %s3 = inlined_call_operand.vmem [shape: bf16[2,128,32], index: 3, kind: input, shape index: {}]
  %s4 = inlined_call_operand.vmem [shape: bf16[2,32,128], index: 4, kind: input, shape index: {}]
  %s5 = inlined_call_operand.vmem [shape: f32[2,1,128], index: 5, kind: input, shape index: {}]
  %s6 = inlined_call_operand.vmem [shape: f32[2,1,128], index: 6, kind: input, shape index: {}]
  %s7 = inlined_call_operand.hbm [shape: f32[16,128], index: 7, kind: output, shape index: {}]
  %s8 = sld [smem:[#allocation0]]
  $region38: #{tpu_custom_call.1} parent=0
    _
  %s10 = ssub.s32 1, %s8
  %s11 = scalar_select 0, %s10, %s8
  $region1: #{tpu_custom_call.1} parent=0
    #allocation2 [shape = 'u8[8192]{0}', space=vmem, size = 0x2000, scoped, tag = 'output window, operand 0, single buffered']
    #allocation3 [shape = 's32[1]{0}', space=sflag, size = 0x4, scoped, tag = 'scoped memory for tpu_custom_call.1']
    %12 = vsyncpa [#allocation3], 0
    // Predicated region
    $region2: #{tpu_custom_call.1} parent=1 // pred_check
      _
    $region3: #{tpu_custom_call.1} parent=1 // pred_check_branch
      %14 = sbr.rel (0) target = $region5
    $region4: #{tpu_custom_call.1} parent=1 // pred_region
      _
    $region5: #{tpu_custom_call.1} parent=1 // pred_fallthru
      _
    // Predicated region
    $region6: #{tpu_custom_call.1} parent=1 // pred_check
      _
    $region7: #{tpu_custom_call.1} parent=1 // pred_check_branch
      %16 = sbr.rel (0) target = $region9
    $region8: #{tpu_custom_call.1} parent=1 // pred_region
      _
    $region9: #{tpu_custom_call.1} parent=1 // pred_fallthru
      _
    // Predicated region
    $region10: #{tpu_custom_call.1} parent=1 // pred_check
      _
    $region11: #{tpu_custom_call.1} parent=1 // pred_check_branch
      %18 = sbr.rel (0) target = $region13
    $region12: #{tpu_custom_call.1} parent=1 // pred_region
      _
    $region13: #{tpu_custom_call.1} parent=1 // pred_fallthru
      _
    // Predicated region
    $region14: #{tpu_custom_call.1} parent=1 // pred_check
      _
    $region15: #{tpu_custom_call.1} parent=1 // pred_check_branch
      %20 = sbr.rel (0) target = $region17
    $region16: #{tpu_custom_call.1} parent=1 // pred_region
      _
    $region17: #{tpu_custom_call.1} parent=1 // pred_fallthru
      _
    // Predicated region
    $region18: #{tpu_custom_call.1} parent=1 // pred_check
      _
    $region19: #{tpu_custom_call.1} parent=1 // pred_check_branch
      %22 = sbr.rel (0) target = $region21
    $region20: #{tpu_custom_call.1} parent=1 // pred_region
      _
    $region21: #{tpu_custom_call.1} parent=1 // pred_fallthru
      _
    // Predicated region
    $region22: #{tpu_custom_call.1} parent=1 // pred_check
      _
    $region23: #{tpu_custom_call.1} parent=1 // pred_check_branch
      %24 = sbr.rel (0) target = $region25
    $region24: #{tpu_custom_call.1} parent=1 // pred_region
      _
    $region25: #{tpu_custom_call.1} parent=1 // pred_fallthru
      _
    // Predicated region
    $region26: #{tpu_custom_call.1} parent=1 // pred_check
      _
    $region27: #{tpu_custom_call.1} parent=1 // pred_check_branch
      %26 = sbr.rel (0) target = $region29
    $region28: #{tpu_custom_call.1} parent=1 // pred_region
      _
    $region29: #{tpu_custom_call.1} parent=1 // pred_fallthru
      _
    %v28 = vld [vmem:[%s0] sm:$0xff]
    %v29 = vld [vmem:[%s0 + $0x8] sm:$0xff]
    %v30 = vld [vmem:[%s1] sm:$0xff]
    %v31 = vld [vmem:[%s1 + $0x8] sm:$0xff]
    %v32 = vld [vmem:[%s2] sm:$0xff]
    %v33 = vld [vmem:[%s2 + $0x8] sm:$0xff]
    %v34 = vlaneseq
    %v35 = vand.u32 %v34, 127
    %vm36 = vcmp.lt.s32.totalorder %v35, 32
    %v37 = vsel %vm36, 1, 0
    %v38 = vcvt.s32.f32 %v37
    %v39 = vld [vmem:[%s3] sm:$0xf]
    %v40 = vld [vmem:[%s3 + $0x4] sm:$0xf]
    %v41 = vld [vmem:[%s3 + $0x8] sm:$0xf]
    %v42 = vld [vmem:[%s3 + $0xc] sm:$0xf]
    %v43 = vld [vmem:[%s3 + $0x10] sm:$0xf]
    %v44 = vld [vmem:[%s3 + $0x14] sm:$0xf]
    %v45 = vld [vmem:[%s3 + $0x18] sm:$0xf]
    %v46 = vld [vmem:[%s3 + $0x1c] sm:$0xf]
    %v47 = vld [vmem:[%s3 + $0x20] sm:$0xf]
    %v48 = vld [vmem:[%s3 + $0x24] sm:$0xf]
    %v49 = vld [vmem:[%s3 + $0x28] sm:$0xf]
    %v50 = vld [vmem:[%s3 + $0x2c] sm:$0xf]
    %v51 = vld [vmem:[%s3 + $0x30] sm:$0xf]
    %v52 = vld [vmem:[%s3 + $0x34] sm:$0xf]
    %v53 = vld [vmem:[%s3 + $0x38] sm:$0xf]
    %v54 = vld [vmem:[%s3 + $0x3c] sm:$0xf]
    %v55 = vld [vmem:[%s4] sm:$0xf]
    %v56 = vld [vmem:[%s4 + $0x4] sm:$0xf]
    %v57 = vld [vmem:[%s4 + $0x8] sm:$0xf]
    %v58 = vld [vmem:[%s4 + $0xc] sm:$0xf]
    %v59 = vld [vmem:[%s5] sm:$0x1]
    %v60 = vld [vmem:[%s6] sm:$0x1]
    %v61 = vpack.c.bf16 %v29, %v28
    %v78 = vunpack.c.l.b16 %v39
    %v79 = vunpack.c.l.b16 %v40
    %v80 = vunpack.c.l.b16 %v41
    %v81 = vunpack.c.l.b16 %v42
    %v82 = vunpack.c.l.b16 %v43
    %v83 = vunpack.c.l.b16 %v44
    %v84 = vunpack.c.l.b16 %v45
    %v85 = vunpack.c.l.b16 %v46
    %v86 = vunpack.c.l.b16 %v47
    %v87 = vunpack.c.l.b16 %v48
    %v88 = vunpack.c.l.b16 %v49
    %v89 = vunpack.c.l.b16 %v50
    %v90 = vunpack.c.l.b16 %v51
    %v91 = vunpack.c.l.b16 %v52
    %v92 = vunpack.c.l.b16 %v53
    %v93 = vunpack.c.l.b16 %v54
    %v94 = vpack.c.b16 %v79, %v78
    %v95 = vpack.c.b16 %v81, %v80
    %v96 = vpack.c.b16 %v83, %v82
    %v97 = vpack.c.b16 %v85, %v84
    %v98 = vpack.c.b16 %v87, %v86
    %v99 = vpack.c.b16 %v89, %v88
    %v100 = vpack.c.b16 %v91, %v90
    %v101 = vpack.c.b16 %v93, %v92
    %110 = vmatprep.subr.bf16.mxu0 0
    %111 = vmatpush1.bf16.msra.mxu0 %v94
    %112 = vmatprep.subr.bf16.mxu0 0
    %113 = vmatpush1.bf16.msra.mxu0 %v95
    %114 = vmatprep.subr.bf16.mxu0 0
    %115 = vmatpush1.bf16.msra.mxu0 %v96
    %116 = vmatprep.subr.bf16.mxu0 0
    %117 = vmatpush1.bf16.msra.mxu0 %v97
    %118 = vmatprep.subr.bf16.mxu0 0
    %119 = vmatpush1.bf16.msra.mxu0 %v98
    %120 = vmatprep.subr.bf16.mxu0 0
    %121 = vmatpush1.bf16.msra.mxu0 %v99
    %122 = vmatprep.subr.bf16.mxu0 0
    %123 = vmatpush1.bf16.msra.mxu0 %v100
    %124 = vmatprep.subr.bf16.mxu0 0
    %125 = vmatpush1.bf16.msra.mxu0 %v101
    %126 = vmatprep.subr.bf16.mxu0 0
    %127 = vmatpush1.bf16.msra.mxu0 0
    %128 = vmatprep.subr.bf16.mxu0 0
    %129 = vmatpush1.bf16.msra.mxu0 0
    %130 = vmatprep.subr.bf16.mxu0 0
    %131 = vmatpush1.bf16.msra.mxu0 0
    %132 = vmatprep.subr.bf16.mxu0 0
    %133 = vmatpush1.bf16.msra.mxu0 0
    %134 = vmatprep.subr.bf16.mxu0 0
    %135 = vmatpush1.bf16.msra.mxu0 0
    %136 = vmatprep.subr.bf16.mxu0 0
    %137 = vmatpush1.bf16.msra.mxu0 0
    %138 = vmatprep.subr.bf16.mxu0 0
    %139 = vmatpush1.bf16.msra.mxu0 0
    %140 = vmatprep.subr.bf16.mxu0 0
    %141 = vmatpush1.bf16.msra.mxu0 0
    %142 = vmatprep.mubr.bf16.mxu0 0
    %143 = vmatmul.mubr.bf16.gmra.mrb[0].mxu0 %v61
    %v144 = vpop.f32.mrb[0].mxu0
    %v145 = vadd.f32 0.0, %v144
    %v146 = vpop.f32.mrb[0].mxu0
    %v147 = vpop.f32.mrb[0].mxu0
    %v148 = vadd.f32 0.0, %v147
    %v149 = vpop.f32.mrb[0].mxu0
    %150 = vdwg.mxu0
    %153 = vrot.lane.b32.xlu0 %v145, 120
    %v154 = vpop.permute.xlu0 %153
    %155 = vrot.lane.b32.xlu0 %v148, 120
    %v156 = vpop.permute.xlu0 %155
    %159 = vrot.lane.b32.xlu0 %v145, 112
    %v160 = vpop.permute.xlu0 %159
    %161 = vrot.lane.b32.xlu0 %v148, 112
    %v162 = vpop.permute.xlu0 %161
    %165 = vrot.lane.b32.xlu0 %v145, 104
    %v166 = vpop.permute.xlu0 %165
    %167 = vrot.lane.b32.xlu0 %v148, 104
    %v168 = vpop.permute.xlu0 %167
    %v171 = vcombine.low %v145, %v160
    %v172 = vcombine.high %v145, %v160
    %v174 = vunpack.c.l.s4 1983009808
    %v175 = vunpack.c.0.s8 %v174
    %v176 = vlaneseq
    %v177 = vshrl.u32 %v176, 7
    %v178 = vsub.s32 %v175, %v177
    %v179 = vrot.slane %v171, %v178
    %v181 = vunpack.c.l.s4 1983009808
    %v182 = vunpack.c.0.s8 %v181
    %v183 = vlaneseq
    %v184 = vshrl.u32 %v183, 7
    %v185 = vsub.s32 %v182, %v184
    %v186 = vrot.slane %v172, %v185
    %v187 = vcombine.low %v154, %v166
    %v188 = vcombine.high %v154, %v166
    %v190 = vunpack.c.l.s4 1983009808
    %v191 = vunpack.c.0.s8 %v190
    %v192 = vlaneseq
    %v193 = vshrl.u32 %v192, 7
    %v194 = vsub.s32 %v191, %v193
    %v195 = vrot.slane %v187, %v194
    %v197 = vunpack.c.l.s4 1983009808
    %v198 = vunpack.c.0.s8 %v197
    %v199 = vlaneseq
    %v200 = vshrl.u32 %v199, 7
    %v201 = vsub.s32 %v198, %v200
    %v202 = vrot.slane %v188, %v201
    %v203 = vcombine.low %v179, %v195
    %v204 = vcombine.high %v179, %v195
    %v206 = vunpack.c.l.s4 1934713408
    %v207 = vunpack.c.0.s8 %v206
    %v208 = vlaneseq
    %v209 = vshrl.u32 %v208, 7
    %v210 = vsub.s32 %v207, %v209
    %v211 = vrot.slane %v203, %v210
    %v213 = vunpack.c.l.s4 1934713408
    %v214 = vunpack.c.0.s8 %v213
    %v215 = vlaneseq
    %v216 = vshrl.u32 %v215, 7
    %v217 = vsub.s32 %v214, %v216
    %v218 = vrot.slane %v204, %v217
    %v219 = vcombine.low %v186, %v202
    %v220 = vcombine.high %v186, %v202
    %v222 = vunpack.c.l.s4 1934713408
    %v223 = vunpack.c.0.s8 %v222
    %v224 = vlaneseq
    %v225 = vshrl.u32 %v224, 7
    %v226 = vsub.s32 %v223, %v225
    %v227 = vrot.slane %v219, %v226
    %v229 = vunpack.c.l.s4 1934713408
    %v230 = vunpack.c.0.s8 %v229
    %v231 = vlaneseq
    %v232 = vshrl.u32 %v231, 7
    %v233 = vsub.s32 %v230, %v232
    %v234 = vrot.slane %v220, %v233
    %v235 = vcombine.high %v211, 0.0
    %v236 = vcombine.high %v218, 0.0
    %v237 = vcombine.high %v227, 0.0
    %v238 = vcombine.high %v234, 0.0
    %v239 = vcombine.low %v148, %v162
    %v240 = vcombine.high %v148, %v162
    %v242 = vunpack.c.l.s4 1983009808
    %v243 = vunpack.c.0.s8 %v242
    %v244 = vlaneseq
    %v245 = vshrl.u32 %v244, 7
    %v246 = vsub.s32 %v243, %v245
    %v247 = vrot.slane %v239, %v246
    %v249 = vunpack.c.l.s4 1983009808
    %v250 = vunpack.c.0.s8 %v249
    %v251 = vlaneseq
    %v252 = vshrl.u32 %v251, 7
    %v253 = vsub.s32 %v250, %v252
    %v254 = vrot.slane %v240, %v253
    %v255 = vcombine.low %v156, %v168
    %v256 = vcombine.high %v156, %v168
    %v258 = vunpack.c.l.s4 1983009808
    %v259 = vunpack.c.0.s8 %v258
    %v260 = vlaneseq
    %v261 = vshrl.u32 %v260, 7
    %v262 = vsub.s32 %v259, %v261
    %v263 = vrot.slane %v255, %v262
    %v265 = vunpack.c.l.s4 1983009808
    %v266 = vunpack.c.0.s8 %v265
    %v267 = vlaneseq
    %v268 = vshrl.u32 %v267, 7
    %v269 = vsub.s32 %v266, %v268
    %v270 = vrot.slane %v256, %v269
    %v271 = vcombine.low %v247, %v263
    %v272 = vcombine.high %v247, %v263
    %v274 = vunpack.c.l.s4 1934713408
    %v275 = vunpack.c.0.s8 %v274
    %v276 = vlaneseq
    %v277 = vshrl.u32 %v276, 7
    %v278 = vsub.s32 %v275, %v277
    %v279 = vrot.slane %v271, %v278
    %v281 = vunpack.c.l.s4 1934713408
    %v282 = vunpack.c.0.s8 %v281
    %v283 = vlaneseq
    %v284 = vshrl.u32 %v283, 7
    %v285 = vsub.s32 %v282, %v284
    %v286 = vrot.slane %v272, %v285
    %v287 = vcombine.low %v254, %v270
    %v288 = vcombine.high %v254, %v270
    %v290 = vunpack.c.l.s4 1934713408
    %v291 = vunpack.c.0.s8 %v290
    %v292 = vlaneseq
    %v293 = vshrl.u32 %v292, 7
    %v294 = vsub.s32 %v291, %v293
    %v295 = vrot.slane %v287, %v294
    %v297 = vunpack.c.l.s4 1934713408
    %v298 = vunpack.c.0.s8 %v297
    %v299 = vlaneseq
    %v300 = vshrl.u32 %v299, 7
    %v301 = vsub.s32 %v298, %v300
    %v302 = vrot.slane %v288, %v301
    %v303 = vcombine.high %v279, 0.0
    %v304 = vcombine.high %v286, 0.0
    %v305 = vcombine.high %v295, 0.0
    %v306 = vcombine.high %v302, 0.0
    %v307 = vcombine.low %v211, %v218
    %v309 = vunpack.c.l.s4 1983009808
    %v310 = vunpack.c.0.s8 %v309
    %v311 = vlaneseq
    %v312 = vshrl.u32 %v311, 7
    %v313 = vsub.s32 %v310, %v312
    %v314 = vrot.slane %v307, %v313
    %v315 = vcombine.low %v235, %v236
    %v317 = vunpack.c.l.s4 1983009808
    %v318 = vunpack.c.0.s8 %v317
    %v319 = vlaneseq
    %v320 = vshrl.u32 %v319, 7
    %v321 = vsub.s32 %v318, %v320
    %v322 = vrot.slane %v315, %v321
    %v323 = vcombine.low %v227, %v234
    %v325 = vunpack.c.l.s4 1983009808
    %v326 = vunpack.c.0.s8 %v325
    %v327 = vlaneseq
    %v328 = vshrl.u32 %v327, 7
    %v329 = vsub.s32 %v326, %v328
    %v330 = vrot.slane %v323, %v329
    %v331 = vcombine.low %v237, %v238
    %v333 = vunpack.c.l.s4 1983009808
    %v334 = vunpack.c.0.s8 %v333
    %v335 = vlaneseq
    %v336 = vshrl.u32 %v335, 7
    %v337 = vsub.s32 %v334, %v336
    %v338 = vrot.slane %v331, %v337
    %v339 = vcombine.low %v314, %v322
    %v340 = vcombine.high %v314, %v322
    %v342 = vunpack.c.l.s4 1934713408
    %v343 = vunpack.c.0.s8 %v342
    %v344 = vlaneseq
    %v345 = vshrl.u32 %v344, 7
    %v346 = vsub.s32 %v343, %v345
    %v347 = vrot.slane %v339, %v346
    %v349 = vunpack.c.l.s4 1934713408
    %v350 = vunpack.c.0.s8 %v349
    %v351 = vlaneseq
    %v352 = vshrl.u32 %v351, 7
    %v353 = vsub.s32 %v350, %v352
    %v354 = vrot.slane %v340, %v353
    %v355 = vcombine.low %v330, %v338
    %v356 = vcombine.high %v330, %v338
    %v358 = vunpack.c.l.s4 1934713408
    %v359 = vunpack.c.0.s8 %v358
    %v360 = vlaneseq
    %v361 = vshrl.u32 %v360, 7
    %v362 = vsub.s32 %v359, %v361
    %v363 = vrot.slane %v355, %v362
    %v365 = vunpack.c.l.s4 1934713408
    %v366 = vunpack.c.0.s8 %v365
    %v367 = vlaneseq
    %v368 = vshrl.u32 %v367, 7
    %v369 = vsub.s32 %v366, %v368
    %v370 = vrot.slane %v356, %v369
    %v371 = vcombine.low %v347, %v363
    %v372 = vcombine.high %v347, %v363
    %v373 = vcombine.low %v354, %v370
    %v374 = vcombine.high %v354, %v370
    %v375 = vcombine.low %v279, %v286
    %v377 = vunpack.c.l.s4 1983009808
    %v378 = vunpack.c.0.s8 %v377
    %v379 = vlaneseq
    %v380 = vshrl.u32 %v379, 7
    %v381 = vsub.s32 %v378, %v380
    %v382 = vrot.slane %v375, %v381
    %v383 = vcombine.low %v303, %v304
    %v385 = vunpack.c.l.s4 1983009808
    %v386 = vunpack.c.0.s8 %v385
    %v387 = vlaneseq
    %v388 = vshrl.u32 %v387, 7
    %v389 = vsub.s32 %v386, %v388
    %v390 = vrot.slane %v383, %v389
    %v391 = vcombine.low %v295, %v302
    %v393 = vunpack.c.l.s4 1983009808
    %v394 = vunpack.c.0.s8 %v393
    %v395 = vlaneseq
    %v396 = vshrl.u32 %v395, 7
    %v397 = vsub.s32 %v394, %v396
    %v398 = vrot.slane %v391, %v397
    %v399 = vcombine.low %v305, %v306
    %v401 = vunpack.c.l.s4 1983009808
    %v402 = vunpack.c.0.s8 %v401
    %v403 = vlaneseq
    %v404 = vshrl.u32 %v403, 7
    %v405 = vsub.s32 %v402, %v404
    %v406 = vrot.slane %v399, %v405
    %v407 = vcombine.low %v382, %v390
    %v408 = vcombine.high %v382, %v390
    %v410 = vunpack.c.l.s4 1934713408
    %v411 = vunpack.c.0.s8 %v410
    %v412 = vlaneseq
    %v413 = vshrl.u32 %v412, 7
    %v414 = vsub.s32 %v411, %v413
    %v415 = vrot.slane %v407, %v414
    %v417 = vunpack.c.l.s4 1934713408
    %v418 = vunpack.c.0.s8 %v417
    %v419 = vlaneseq
    %v420 = vshrl.u32 %v419, 7
    %v421 = vsub.s32 %v418, %v420
    %v422 = vrot.slane %v408, %v421
    %v423 = vcombine.low %v398, %v406
    %v424 = vcombine.high %v398, %v406
    %v426 = vunpack.c.l.s4 1934713408
    %v427 = vunpack.c.0.s8 %v426
    %v428 = vlaneseq
    %v429 = vshrl.u32 %v428, 7
    %v430 = vsub.s32 %v427, %v429
    %v431 = vrot.slane %v423, %v430
    %v433 = vunpack.c.l.s4 1934713408
    %v434 = vunpack.c.0.s8 %v433
    %v435 = vlaneseq
    %v436 = vshrl.u32 %v435, 7
    %v437 = vsub.s32 %v434, %v436
    %v438 = vrot.slane %v424, %v437
    %v439 = vcombine.low %v415, %v431
    %v440 = vcombine.high %v415, %v431
    %v441 = vcombine.low %v422, %v438
    %v442 = vcombine.high %v422, %v438
    %v443 = vpack.c.bf16 %v439, %v371
    %v444 = vpack.c.bf16 %v440, %v372
    %v445 = vpack.c.bf16 %v441, %v373
    %v446 = vpack.c.bf16 %v442, %v374
    %vm447 = vcmask 64512
    %v449 = vsel %vm447, %v443, 0
    %451 = vmatprep.subr.bf16.mxu0 0
    %452 = vmatpush1.bf16.xpose.msra.mxu0 %v449
    %453 = vmatprep.subr.bf16.mxu0 0
    %454 = vmatpush1.bf16.xpose.msra.mxu0 0
    %455 = vmatprep.subr.bf16.mxu0 0
    %456 = vmatpush1.bf16.xpose.msra.mxu0 0
    %457 = vmatprep.subr.bf16.mxu0 0
    %458 = vmatpush1.bf16.xpose.msra.mxu0 0
    %459 = vmatprep.subr.bf16.mxu0 0
    %460 = vmatpush1.bf16.xpose.msra.mxu0 0
    %461 = vmatprep.subr.bf16.mxu0 0
    %462 = vmatpush1.bf16.xpose.msra.mxu0 0
    %463 = vmatprep.subr.bf16.mxu0 0
    %464 = vmatpush1.bf16.xpose.msra.mxu0 0
    %465 = vmatprep.subr.bf16.mxu0 0
    %466 = vmatpush1.bf16.xpose.msra.mxu0 0
    %467 = vmatprep.subr.bf16.mxu0 0
    %468 = vmatpush1.bf16.xpose.msra.mxu0 0
    %469 = vmatprep.subr.bf16.mxu0 0
    %470 = vmatpush1.bf16.xpose.msra.mxu0 0
    %471 = vmatprep.subr.bf16.mxu0 0
    %472 = vmatpush1.bf16.xpose.msra.mxu0 0
    %473 = vmatprep.subr.bf16.mxu0 0
    %474 = vmatpush1.bf16.xpose.msra.mxu0 0
    %475 = vmatprep.subr.bf16.mxu0 0
    %476 = vmatpush1.bf16.xpose.msra.mxu0 0
    %477 = vmatprep.subr.bf16.mxu0 0
    %478 = vmatpush1.bf16.xpose.msra.mxu0 0
    %479 = vmatprep.subr.bf16.mxu0 0
    %480 = vmatpush1.bf16.xpose.msra.mxu0 0
    %481 = vmatprep.subr.bf16.mxu0 0
    %482 = vmatpush1.bf16.xpose.msra.mxu0 0
    %483 = vmatprep.mubr.bf16.mxu0 0
    %484 = vmatmul.mubr.bf16.gmra.mrb[0].mxu0 %v449
    %v485 = vpop.f32.mrb[0].mxu0
    %v486 = vadd.f32 0.0, %v485
    %v487 = vpop.f32.mrb[0].mxu0
    %v488 = vpop.f32.mrb[0].mxu0
    %v489 = vadd.f32 0.0, %v488
    %v490 = vpop.f32.mrb[0].mxu0
    %491 = vdwg.mxu0
    %v493 = vsel %vm447, %v444, 0
    %495 = vmatprep.subr.bf16.mxu0 0
    %496 = vmatpush1.bf16.xpose.msra.mxu0 %v493
    %497 = vmatprep.subr.bf16.mxu0 0
    %498 = vmatpush1.bf16.xpose.msra.mxu0 0
    %499 = vmatprep.subr.bf16.mxu0 0
    %500 = vmatpush1.bf16.xpose.msra.mxu0 0
    %501 = vmatprep.subr.bf16.mxu0 0
    %502 = vmatpush1.bf16.xpose.msra.mxu0 0
    %503 = vmatprep.subr.bf16.mxu0 0
    %504 = vmatpush1.bf16.xpose.msra.mxu0 0
    %505 = vmatprep.subr.bf16.mxu0 0
    %506 = vmatpush1.bf16.xpose.msra.mxu0 0
    %507 = vmatprep.subr.bf16.mxu0 0
    %508 = vmatpush1.bf16.xpose.msra.mxu0 0
    %509 = vmatprep.subr.bf16.mxu0 0
    %510 = vmatpush1.bf16.xpose.msra.mxu0 0
    %511 = vmatprep.subr.bf16.mxu0 0
    %512 = vmatpush1.bf16.xpose.msra.mxu0 0
    %513 = vmatprep.subr.bf16.mxu0 0
    %514 = vmatpush1.bf16.xpose.msra.mxu0 0
    %515 = vmatprep.subr.bf16.mxu0 0
    %516 = vmatpush1.bf16.xpose.msra.mxu0 0
    %517 = vmatprep.subr.bf16.mxu0 0
    %518 = vmatpush1.bf16.xpose.msra.mxu0 0
    %519 = vmatprep.subr.bf16.mxu0 0
    %520 = vmatpush1.bf16.xpose.msra.mxu0 0
    %521 = vmatprep.subr.bf16.mxu0 0
    %522 = vmatpush1.bf16.xpose.msra.mxu0 0
    %523 = vmatprep.subr.bf16.mxu0 0
    %524 = vmatpush1.bf16.xpose.msra.mxu0 0
    %525 = vmatprep.subr.bf16.mxu0 0
    %526 = vmatpush1.bf16.xpose.msra.mxu0 0
    %527 = vmatprep.mubr.bf16.mxu0 0
    %528 = vmatmul.mubr.bf16.gmra.mrb[0].mxu0 %v493
    %v529 = vpop.f32.mrb[0].mxu0
    %v530 = vadd.f32 0.0, %v529
    %v531 = vpop.f32.mrb[0].mxu0
    %v532 = vpop.f32.mrb[0].mxu0
    %v533 = vadd.f32 0.0, %v532
    %v534 = vpop.f32.mrb[0].mxu0
    %535 = vdwg.mxu0
    %v537 = vsel %vm447, %v445, 0
    %539 = vmatprep.subr.bf16.mxu0 0
    %540 = vmatpush1.bf16.xpose.msra.mxu0 %v537
    %541 = vmatprep.subr.bf16.mxu0 0
    %542 = vmatpush1.bf16.xpose.msra.mxu0 0
    %543 = vmatprep.subr.bf16.mxu0 0
    %544 = vmatpush1.bf16.xpose.msra.mxu0 0
    %545 = vmatprep.subr.bf16.mxu0 0
    %546 = vmatpush1.bf16.xpose.msra.mxu0 0
    %547 = vmatprep.subr.bf16.mxu0 0
    %548 = vmatpush1.bf16.xpose.msra.mxu0 0
    %549 = vmatprep.subr.bf16.mxu0 0
    %550 = vmatpush1.bf16.xpose.msra.mxu0 0
    %551 = vmatprep.subr.bf16.mxu0 0
    %552 = vmatpush1.bf16.xpose.msra.mxu0 0
    %553 = vmatprep.subr.bf16.mxu0 0
    %554 = vmatpush1.bf16.xpose.msra.mxu0 0
    %555 = vmatprep.subr.bf16.mxu0 0
    %556 = vmatpush1.bf16.xpose.msra.mxu0 0
    %557 = vmatprep.subr.bf16.mxu0 0
    %558 = vmatpush1.bf16.xpose.msra.mxu0 0
    %559 = vmatprep.subr.bf16.mxu0 0
    %560 = vmatpush1.bf16.xpose.msra.mxu0 0
    %561 = vmatprep.subr.bf16.mxu0 0
    %562 = vmatpush1.bf16.xpose.msra.mxu0 0
    %563 = vmatprep.subr.bf16.mxu0 0
    %564 = vmatpush1.bf16.xpose.msra.mxu0 0
    %565 = vmatprep.subr.bf16.mxu0 0
    %566 = vmatpush1.bf16.xpose.msra.mxu0 0
    %567 = vmatprep.subr.bf16.mxu0 0
    %568 = vmatpush1.bf16.xpose.msra.mxu0 0
    %569 = vmatprep.subr.bf16.mxu0 0
    %570 = vmatpush1.bf16.xpose.msra.mxu0 0
    %571 = vmatprep.mubr.bf16.mxu0 0
    %572 = vmatmul.mubr.bf16.gmra.mrb[0].mxu0 %v537
    %v573 = vpop.f32.mrb[0].mxu0
    %v574 = vadd.f32 0.0, %v573
    %v575 = vpop.f32.mrb[0].mxu0
    %v576 = vpop.f32.mrb[0].mxu0
    %v577 = vadd.f32 0.0, %v576
    %v578 = vpop.f32.mrb[0].mxu0
    %579 = vdwg.mxu0
    %v581 = vsel %vm447, %v446, 0
    %583 = vmatprep.subr.bf16.mxu0 0
    %584 = vmatpush1.bf16.xpose.msra.mxu0 %v581
    %585 = vmatprep.subr.bf16.mxu0 0
    %586 = vmatpush1.bf16.xpose.msra.mxu0 0
    %587 = vmatprep.subr.bf16.mxu0 0
    %588 = vmatpush1.bf16.xpose.msra.mxu0 0
    %589 = vmatprep.subr.bf16.mxu0 0
    %590 = vmatpush1.bf16.xpose.msra.mxu0 0
    %591 = vmatprep.subr.bf16.mxu0 0
    %592 = vmatpush1.bf16.xpose.msra.mxu0 0
    %593 = vmatprep.subr.bf16.mxu0 0
    %594 = vmatpush1.bf16.xpose.msra.mxu0 0
    %595 = vmatprep.subr.bf16.mxu0 0
    %596 = vmatpush1.bf16.xpose.msra.mxu0 0
    %597 = vmatprep.subr.bf16.mxu0 0
    %598 = vmatpush1.bf16.xpose.msra.mxu0 0
    %599 = vmatprep.subr.bf16.mxu0 0
    %600 = vmatpush1.bf16.xpose.msra.mxu0 0
    %601 = vmatprep.subr.bf16.mxu0 0
    %602 = vmatpush1.bf16.xpose.msra.mxu0 0
    %603 = vmatprep.subr.bf16.mxu0 0
    %604 = vmatpush1.bf16.xpose.msra.mxu0 0
    %605 = vmatprep.subr.bf16.mxu0 0
    %606 = vmatpush1.bf16.xpose.msra.mxu0 0
    %607 = vmatprep.subr.bf16.mxu0 0
    %608 = vmatpush1.bf16.xpose.msra.mxu0 0
    %609 = vmatprep.subr.bf16.mxu0 0
    %610 = vmatpush1.bf16.xpose.msra.mxu0 0
    %611 = vmatprep.subr.bf16.mxu0 0
    %612 = vmatpush1.bf16.xpose.msra.mxu0 0
    %613 = vmatprep.subr.bf16.mxu0 0
    %614 = vmatpush1.bf16.xpose.msra.mxu0 0
    %615 = vmatprep.mubr.bf16.mxu0 0
    %616 = vmatmul.mubr.bf16.gmra.mrb[0].mxu0 %v581
    %v617 = vpop.f32.mrb[0].mxu0
    %v618 = vadd.f32 0.0, %v617
    %v619 = vpop.f32.mrb[0].mxu0
    %v620 = vpop.f32.mrb[0].mxu0
    %v621 = vadd.f32 0.0, %v620
    %v622 = vpop.f32.mrb[0].mxu0
    %623 = vdwg.mxu0
    %v624 = vmul.f32 %v486, 0.35355338
    %v625 = vmul.f32 %v489, 0.35355338
    %v626 = vmul.f32 %v530, 0.35355338
    %v627 = vmul.f32 %v533, 0.35355338
    %v628 = vmul.f32 %v574, 0.35355338
    %v629 = vmul.f32 %v577, 0.35355338
    %v630 = vmul.f32 %v618, 0.35355338
    %v631 = vmul.f32 %v621, 0.35355338
    %v632 = vadd.f32 %v624, %v32
    %v633 = vadd.f32 %v625, %v33
    %v634 = vadd.f32 %v626, %v32
    %v635 = vadd.f32 %v627, %v33
    %v636 = vadd.f32 %v628, %v32
    %v637 = vadd.f32 %v629, %v33
    %v638 = vadd.f32 %v630, %v32
    %v639 = vadd.f32 %v631, %v33
    %vm640 = vcmask 130048
    %v641 = vsel %vm640, %v632, -inf
    %642 = vmax.xlane.f32.xlu0 %v641
    %v643 = vpop.xlane.xlu0 %642
    %v644 = vsel %vm640, %v633, -inf
    %645 = vmax.xlane.f32.xlu0 %v644
    %v646 = vpop.xlane.xlu0 %645
    %v647 = vsel %vm640, %v634, -inf
    %648 = vmax.xlane.f32.xlu0 %v647
    %v649 = vpop.xlane.xlu0 %648
    %v650 = vsel %vm640, %v635, -inf
    %651 = vmax.xlane.f32.xlu0 %v650
    %v652 = vpop.xlane.xlu0 %651
    %v653 = vsel %vm640, %v636, -inf
    %654 = vmax.xlane.f32.xlu0 %v653
    %v655 = vpop.xlane.xlu0 %654
    %v656 = vsel %vm640, %v637, -inf
    %657 = vmax.xlane.f32.xlu0 %v656
    %v658 = vpop.xlane.xlu0 %657
    %v659 = vsel %vm640, %v638, -inf
    %660 = vmax.xlane.f32.xlu0 %v659
    %v661 = vpop.xlane.xlu0 %660
    %v662 = vsel %vm640, %v639, -inf
    %663 = vmax.xlane.f32.xlu0 %v662
    %v664 = vpop.xlane.xlu0 %663
    %v665 = vsub.f32 %v632, %v643
    %v666 = vsub.f32 %v633, %v646
    %v667 = vsub.f32 %v634, %v649
    %v668 = vsub.f32 %v635, %v652
    %v669 = vsub.f32 %v636, %v655
    %v670 = vsub.f32 %v637, %v658
    %v671 = vsub.f32 %v638, %v661
    %v672 = vsub.f32 %v639, %v664
    %v673 = vmul.f32 %v665, 1.442695
    %v674 = vpow.pop %v673
    %v675 = vmul.f32 %v666, 1.442695
    %v676 = vpow.pop %v675
    %v677 = vmul.f32 %v667, 1.442695
    %v678 = vpow.pop %v677
    %v679 = vmul.f32 %v668, 1.442695
    %v680 = vpow.pop %v679
    %v681 = vmul.f32 %v669, 1.442695
    %v682 = vpow.pop %v681
    %v683 = vmul.f32 %v670, 1.442695
    %v684 = vpow.pop %v683
    %v685 = vmul.f32 %v671, 1.442695
    %v686 = vpow.pop %v685
    %v687 = vmul.f32 %v672, 1.442695
    %v688 = vpow.pop %v687
    %v689 = vsel %vm640, %v674, 0.0
    %690 = vadd.xlane.f32.xlu0 %v689
    %v691 = vpop.xlane.xlu0 %690
    %v692 = vsel %vm640, %v676, 0.0
    %693 = vadd.xlane.f32.xlu0 %v692
    %v694 = vpop.xlane.xlu0 %693
    %v695 = vsel %vm640, %v678, 0.0
    %696 = vadd.xlane.f32.xlu0 %v695
    %v697 = vpop.xlane.xlu0 %696
    %v698 = vsel %vm640, %v680, 0.0
    %699 = vadd.xlane.f32.xlu0 %v698
    %v700 = vpop.xlane.xlu0 %699
    %v701 = vsel %vm640, %v682, 0.0
    %702 = vadd.xlane.f32.xlu0 %v701
    %v703 = vpop.xlane.xlu0 %702
    %v704 = vsel %vm640, %v684, 0.0
    %705 = vadd.xlane.f32.xlu0 %v704
    %v706 = vpop.xlane.xlu0 %705
    %v707 = vsel %vm640, %v686, 0.0
    %708 = vadd.xlane.f32.xlu0 %v707
    %v709 = vpop.xlane.xlu0 %708
    %v710 = vsel %vm640, %v688, 0.0
    %711 = vadd.xlane.f32.xlu0 %v710
    %v712 = vpop.xlane.xlu0 %711
    %v713 = vrcp.pop %v691
    %v714 = vrcp.pop %v694
    %v715 = vrcp.pop %v697
    %v716 = vrcp.pop %v700
    %v717 = vrcp.pop %v703
    %v718 = vrcp.pop %v706
    %v719 = vrcp.pop %v709
    %v720 = vrcp.pop %v712
    %v721 = vmul.f32 %v674, %v713
    %v722 = vmul.f32 %v676, %v714
    %v723 = vmul.f32 %v678, %v715
    %v724 = vmul.f32 %v680, %v716
    %v725 = vmul.f32 %v682, %v717
    %v726 = vmul.f32 %v684, %v718
    %v727 = vmul.f32 %v686, %v719
    %v728 = vmul.f32 %v688, %v720
    %v729 = vpack.c.bf16 %v722, %v721
    %v730 = vpack.c.bf16 %v724, %v723
    %v731 = vpack.c.bf16 %v726, %v725
    %v732 = vpack.c.bf16 %v728, %v727
    %v734 = vsel %vm640, %v729, 0
    %736 = vmatprep.subr.bf16.mxu0 0
    %737 = vmatpush1.bf16.msra.mxu0 %v443
    %738 = vmatprep.subr.bf16.mxu0 0
    %739 = vmatpush1.bf16.msra.mxu0 0
    %740 = vmatprep.subr.bf16.mxu0 0
    %741 = vmatpush1.bf16.msra.mxu0 0
    %742 = vmatprep.subr.bf16.mxu0 0
    %743 = vmatpush1.bf16.msra.mxu0 0
    %744 = vmatprep.subr.bf16.mxu0 0
    %745 = vmatpush1.bf16.msra.mxu0 0
    %746 = vmatprep.subr.bf16.mxu0 0
    %747 = vmatpush1.bf16.msra.mxu0 0
    %748 = vmatprep.subr.bf16.mxu0 0
    %749 = vmatpush1.bf16.msra.mxu0 0
    %750 = vmatprep.subr.bf16.mxu0 0
    %751 = vmatpush1.bf16.msra.mxu0 0
    %752 = vmatprep.subr.bf16.mxu0 0
    %753 = vmatpush1.bf16.msra.mxu0 0
    %754 = vmatprep.subr.bf16.mxu0 0
    %755 = vmatpush1.bf16.msra.mxu0 0
    %756 = vmatprep.subr.bf16.mxu0 0
    %757 = vmatpush1.bf16.msra.mxu0 0
    %758 = vmatprep.subr.bf16.mxu0 0
    %759 = vmatpush1.bf16.msra.mxu0 0
    %760 = vmatprep.subr.bf16.mxu0 0
    %761 = vmatpush1.bf16.msra.mxu0 0
    %762 = vmatprep.subr.bf16.mxu0 0
    %763 = vmatpush1.bf16.msra.mxu0 0
    %764 = vmatprep.subr.bf16.mxu0 0
    %765 = vmatpush1.bf16.msra.mxu0 0
    %766 = vmatprep.subr.bf16.mxu0 0
    %767 = vmatpush1.bf16.msra.mxu0 0
    %768 = vmatprep.mubr.bf16.mxu0 0
    %769 = vmatmul.mubr.bf16.gmra.mrb[0].mxu0 %v734
    %v770 = vpop.f32.mrb[0].mxu0
    %v771 = vadd.f32 0.0, %v770
    %v772 = vpop.f32.mrb[0].mxu0
    %v773 = vpop.f32.mrb[0].mxu0
    %v774 = vadd.f32 0.0, %v773
    %v775 = vpop.f32.mrb[0].mxu0
    %776 = vdwg.mxu0
    %v778 = vsel %vm640, %v730, 0
    %780 = vmatprep.subr.bf16.mxu0 0
    %781 = vmatpush1.bf16.msra.mxu0 %v444
    %782 = vmatprep.subr.bf16.mxu0 0
    %783 = vmatpush1.bf16.msra.mxu0 0
    %784 = vmatprep.subr.bf16.mxu0 0
    %785 = vmatpush1.bf16.msra.mxu0 0
    %786 = vmatprep.subr.bf16.mxu0 0
    %787 = vmatpush1.bf16.msra.mxu0 0
    %788 = vmatprep.subr.bf16.mxu0 0
    %789 = vmatpush1.bf16.msra.mxu0 0
    %790 = vmatprep.subr.bf16.mxu0 0
    %791 = vmatpush1.bf16.msra.mxu0 0
    %792 = vmatprep.subr.bf16.mxu0 0
    %793 = vmatpush1.bf16.msra.mxu0 0
    %794 = vmatprep.subr.bf16.mxu0 0
    %795 = vmatpush1.bf16.msra.mxu0 0
    %796 = vmatprep.subr.bf16.mxu0 0
    %797 = vmatpush1.bf16.msra.mxu0 0
    %798 = vmatprep.subr.bf16.mxu0 0
    %799 = vmatpush1.bf16.msra.mxu0 0
    %800 = vmatprep.subr.bf16.mxu0 0
    %801 = vmatpush1.bf16.msra.mxu0 0
    %802 = vmatprep.subr.bf16.mxu0 0
    %803 = vmatpush1.bf16.msra.mxu0 0
    %804 = vmatprep.subr.bf16.mxu0 0
    %805 = vmatpush1.bf16.msra.mxu0 0
    %806 = vmatprep.subr.bf16.mxu0 0
    %807 = vmatpush1.bf16.msra.mxu0 0
    %808 = vmatprep.subr.bf16.mxu0 0
    %809 = vmatpush1.bf16.msra.mxu0 0
    %810 = vmatprep.subr.bf16.mxu0 0
    %811 = vmatpush1.bf16.msra.mxu0 0
    %812 = vmatprep.mubr.bf16.mxu0 0
    %813 = vmatmul.mubr.bf16.gmra.mrb[0].mxu0 %v778
    %v814 = vpop.f32.mrb[0].mxu0
    %v815 = vadd.f32 0.0, %v814
    %v816 = vpop.f32.mrb[0].mxu0
    %v817 = vpop.f32.mrb[0].mxu0
    %v818 = vadd.f32 0.0, %v817
    %v819 = vpop.f32.mrb[0].mxu0
    %820 = vdwg.mxu0
    %v822 = vsel %vm640, %v731, 0
    %824 = vmatprep.subr.bf16.mxu0 0
    %825 = vmatpush1.bf16.msra.mxu0 %v445
    %826 = vmatprep.subr.bf16.mxu0 0
    %827 = vmatpush1.bf16.msra.mxu0 0
    %828 = vmatprep.subr.bf16.mxu0 0
    %829 = vmatpush1.bf16.msra.mxu0 0
    %830 = vmatprep.subr.bf16.mxu0 0
    %831 = vmatpush1.bf16.msra.mxu0 0
    %832 = vmatprep.subr.bf16.mxu0 0
    %833 = vmatpush1.bf16.msra.mxu0 0
    %834 = vmatprep.subr.bf16.mxu0 0
    %835 = vmatpush1.bf16.msra.mxu0 0
    %836 = vmatprep.subr.bf16.mxu0 0
    %837 = vmatpush1.bf16.msra.mxu0 0
    %838 = vmatprep.subr.bf16.mxu0 0
    %839 = vmatpush1.bf16.msra.mxu0 0
    %840 = vmatprep.subr.bf16.mxu0 0
    %841 = vmatpush1.bf16.msra.mxu0 0
    %842 = vmatprep.subr.bf16.mxu0 0
    %843 = vmatpush1.bf16.msra.mxu0 0
    %844 = vmatprep.subr.bf16.mxu0 0
    %845 = vmatpush1.bf16.msra.mxu0 0
    %846 = vmatprep.subr.bf16.mxu0 0
    %847 = vmatpush1.bf16.msra.mxu0 0
    %848 = vmatprep.subr.bf16.mxu0 0
    %849 = vmatpush1.bf16.msra.mxu0 0
    %850 = vmatprep.subr.bf16.mxu0 0
    %851 = vmatpush1.bf16.msra.mxu0 0
    %852 = vmatprep.subr.bf16.mxu0 0
    %853 = vmatpush1.bf16.msra.mxu0 0
    %854 = vmatprep.subr.bf16.mxu0 0
    %855 = vmatpush1.bf16.msra.mxu0 0
    %856 = vmatprep.mubr.bf16.mxu0 0
    %857 = vmatmul.mubr.bf16.gmra.mrb[0].mxu0 %v822
    %v858 = vpop.f32.mrb[0].mxu0
    %v859 = vadd.f32 0.0, %v858
    %v860 = vpop.f32.mrb[0].mxu0
    %v861 = vpop.f32.mrb[0].mxu0
    %v862 = vadd.f32 0.0, %v861
    %v863 = vpop.f32.mrb[0].mxu0
    %864 = vdwg.mxu0
    %v866 = vsel %vm640, %v732, 0
    %868 = vmatprep.subr.bf16.mxu0 0
    %869 = vmatpush1.bf16.msra.mxu0 %v446
    %870 = vmatprep.subr.bf16.mxu0 0
    %871 = vmatpush1.bf16.msra.mxu0 0
    %872 = vmatprep.subr.bf16.mxu0 0
    %873 = vmatpush1.bf16.msra.mxu0 0
    %874 = vmatprep.subr.bf16.mxu0 0
    %875 = vmatpush1.bf16.msra.mxu0 0
    %876 = vmatprep.subr.bf16.mxu0 0
    %877 = vmatpush1.bf16.msra.mxu0 0
    %878 = vmatprep.subr.bf16.mxu0 0
    %879 = vmatpush1.bf16.msra.mxu0 0
    %880 = vmatprep.subr.bf16.mxu0 0
    %881 = vmatpush1.bf16.msra.mxu0 0
    %882 = vmatprep.subr.bf16.mxu0 0
    %883 = vmatpush1.bf16.msra.mxu0 0
    %884 = vmatprep.subr.bf16.mxu0 0
    %885 = vmatpush1.bf16.msra.mxu0 0
    %886 = vmatprep.subr.bf16.mxu0 0
    %887 = vmatpush1.bf16.msra.mxu0 0
    %888 = vmatprep.subr.bf16.mxu0 0
    %889 = vmatpush1.bf16.msra.mxu0 0
    %890 = vmatprep.subr.bf16.mxu0 0
    %891 = vmatpush1.bf16.msra.mxu0 0
    %892 = vmatprep.subr.bf16.mxu0 0
    %893 = vmatpush1.bf16.msra.mxu0 0
    %894 = vmatprep.subr.bf16.mxu0 0
    %895 = vmatpush1.bf16.msra.mxu0 0
    %896 = vmatprep.subr.bf16.mxu0 0
    %897 = vmatpush1.bf16.msra.mxu0 0
    %898 = vmatprep.subr.bf16.mxu0 0
    %899 = vmatpush1.bf16.msra.mxu0 0
    %900 = vmatprep.mubr.bf16.mxu0 0
    %901 = vmatmul.mubr.bf16.gmra.mrb[0].mxu0 %v866
    %v902 = vpop.f32.mrb[0].mxu0
    %v903 = vadd.f32 0.0, %v902
    %v904 = vpop.f32.mrb[0].mxu0
    %v905 = vpop.f32.mrb[0].mxu0
    %v906 = vadd.f32 0.0, %v905
    %v907 = vpop.f32.mrb[0].mxu0
    %908 = vdwg.mxu0
    %v909 = vcombine.low %v771, %v859
    %v910 = vcombine.high %v771, %v859
    %v912 = vunpack.c.l.s4 1983009808
    %v913 = vunpack.c.0.s8 %v912
    %v914 = vlaneseq
    %v915 = vshrl.u32 %v914, 7
    %v916 = vsub.s32 %v913, %v915
    %v917 = vrot.slane %v909, %v916
    %v919 = vunpack.c.l.s4 1983009808
    %v920 = vunpack.c.0.s8 %v919
    %v921 = vlaneseq
    %v922 = vshrl.u32 %v921, 7
    %v923 = vsub.s32 %v920, %v922
    %v924 = vrot.slane %v910, %v923
    %v925 = vcombine.low %v815, %v903
    %v926 = vcombine.high %v815, %v903
    %v928 = vunpack.c.l.s4 1983009808
    %v929 = vunpack.c.0.s8 %v928
    %v930 = vlaneseq
    %v931 = vshrl.u32 %v930, 7
    %v932 = vsub.s32 %v929, %v931
    %v933 = vrot.slane %v925, %v932
    %v935 = vunpack.c.l.s4 1983009808
    %v936 = vunpack.c.0.s8 %v935
    %v937 = vlaneseq
    %v938 = vshrl.u32 %v937, 7
    %v939 = vsub.s32 %v936, %v938
    %v940 = vrot.slane %v926, %v939
    %v941 = vcombine.low %v917, %v933
    %v942 = vcombine.high %v917, %v933
    %v944 = vunpack.c.l.s4 1934713408
    %v945 = vunpack.c.0.s8 %v944
    %v946 = vlaneseq
    %v947 = vshrl.u32 %v946, 7
    %v948 = vsub.s32 %v945, %v947
    %v949 = vrot.slane %v941, %v948
    %v951 = vunpack.c.l.s4 1934713408
    %v952 = vunpack.c.0.s8 %v951
    %v953 = vlaneseq
    %v954 = vshrl.u32 %v953, 7
    %v955 = vsub.s32 %v952, %v954
    %v956 = vrot.slane %v942, %v955
    %v957 = vcombine.low %v924, %v940
    %v958 = vcombine.high %v924, %v940
    %v960 = vunpack.c.l.s4 1934713408
    %v961 = vunpack.c.0.s8 %v960
    %v962 = vlaneseq
    %v963 = vshrl.u32 %v962, 7
    %v964 = vsub.s32 %v961, %v963
    %v965 = vrot.slane %v957, %v964
    %v967 = vunpack.c.l.s4 1934713408
    %v968 = vunpack.c.0.s8 %v967
    %v969 = vlaneseq
    %v970 = vshrl.u32 %v969, 7
    %v971 = vsub.s32 %v968, %v970
    %v972 = vrot.slane %v958, %v971
    %v973 = vcombine.high %v949, 0.0
    %v974 = vcombine.high %v956, 0.0
    %v975 = vcombine.high %v965, 0.0
    %v976 = vcombine.high %v972, 0.0
    %v977 = vcombine.low %v774, %v862
    %v978 = vcombine.high %v774, %v862
    %v980 = vunpack.c.l.s4 1983009808
    %v981 = vunpack.c.0.s8 %v980
    %v982 = vlaneseq
    %v983 = vshrl.u32 %v982, 7
    %v984 = vsub.s32 %v981, %v983
    %v985 = vrot.slane %v977, %v984
    %v987 = vunpack.c.l.s4 1983009808
    %v988 = vunpack.c.0.s8 %v987
    %v989 = vlaneseq
    %v990 = vshrl.u32 %v989, 7
    %v991 = vsub.s32 %v988, %v990
    %v992 = vrot.slane %v978, %v991
    %v993 = vcombine.low %v818, %v906
    %v994 = vcombine.high %v818, %v906
    %v996 = vunpack.c.l.s4 1983009808
    %v997 = vunpack.c.0.s8 %v996
    %v998 = vlaneseq
    %v999 = vshrl.u32 %v998, 7
    %v1000 = vsub.s32 %v997, %v999
    %v1001 = vrot.slane %v993, %v1000
    %v1003 = vunpack.c.l.s4 1983009808
    %v1004 = vunpack.c.0.s8 %v1003
    %v1005 = vlaneseq
    %v1006 = vshrl.u32 %v1005, 7
    %v1007 = vsub.s32 %v1004, %v1006
    %v1008 = vrot.slane %v994, %v1007
    %v1009 = vcombine.low %v985, %v1001
    %v1010 = vcombine.high %v985, %v1001
    %v1012 = vunpack.c.l.s4 1934713408
    %v1013 = vunpack.c.0.s8 %v1012
    %v1014 = vlaneseq
    %v1015 = vshrl.u32 %v1014, 7
    %v1016 = vsub.s32 %v1013, %v1015
    %v1017 = vrot.slane %v1009, %v1016
    %v1019 = vunpack.c.l.s4 1934713408
    %v1020 = vunpack.c.0.s8 %v1019
    %v1021 = vlaneseq
    %v1022 = vshrl.u32 %v1021, 7
    %v1023 = vsub.s32 %v1020, %v1022
    %v1024 = vrot.slane %v1010, %v1023
    %v1025 = vcombine.low %v992, %v1008
    %v1026 = vcombine.high %v992, %v1008
    %v1028 = vunpack.c.l.s4 1934713408
    %v1029 = vunpack.c.0.s8 %v1028
    %v1030 = vlaneseq
    %v1031 = vshrl.u32 %v1030, 7
    %v1032 = vsub.s32 %v1029, %v1031
    %v1033 = vrot.slane %v1025, %v1032
    %v1035 = vunpack.c.l.s4 1934713408
    %v1036 = vunpack.c.0.s8 %v1035
    %v1037 = vlaneseq
    %v1038 = vshrl.u32 %v1037, 7
    %v1039 = vsub.s32 %v1036, %v1038
    %v1040 = vrot.slane %v1026, %v1039
    %v1041 = vcombine.high %v1017, 0.0
    %v1042 = vcombine.high %v1024, 0.0
    %v1043 = vcombine.high %v1033, 0.0
    %v1044 = vcombine.high %v1040, 0.0
    %v1045 = vcombine.low %v949, %v956
    %v1047 = vunpack.c.l.s4 1983009808
    %v1048 = vunpack.c.0.s8 %v1047
    %v1049 = vlaneseq
    %v1050 = vshrl.u32 %v1049, 7
    %v1051 = vsub.s32 %v1048, %v1050
    %v1052 = vrot.slane %v1045, %v1051
    %v1053 = vcombine.low %v973, %v974
    %v1055 = vunpack.c.l.s4 1983009808
    %v1056 = vunpack.c.0.s8 %v1055
    %v1057 = vlaneseq
    %v1058 = vshrl.u32 %v1057, 7
    %v1059 = vsub.s32 %v1056, %v1058
    %v1060 = vrot.slane %v1053, %v1059
    %v1061 = vcombine.low %v965, %v972
    %v1063 = vunpack.c.l.s4 1983009808
    %v1064 = vunpack.c.0.s8 %v1063
    %v1065 = vlaneseq
    %v1066 = vshrl.u32 %v1065, 7
    %v1067 = vsub.s32 %v1064, %v1066
    %v1068 = vrot.slane %v1061, %v1067
    %v1069 = vcombine.low %v975, %v976
    %v1071 = vunpack.c.l.s4 1983009808
    %v1072 = vunpack.c.0.s8 %v1071
    %v1073 = vlaneseq
    %v1074 = vshrl.u32 %v1073, 7
    %v1075 = vsub.s32 %v1072, %v1074
    %v1076 = vrot.slane %v1069, %v1075
    %v1077 = vcombine.low %v1052, %v1060
    %v1078 = vcombine.high %v1052, %v1060
    %v1080 = vunpack.c.l.s4 1934713408
    %v1081 = vunpack.c.0.s8 %v1080
    %v1082 = vlaneseq
    %v1083 = vshrl.u32 %v1082, 7
    %v1084 = vsub.s32 %v1081, %v1083
    %v1085 = vrot.slane %v1077, %v1084
    %v1087 = vunpack.c.l.s4 1934713408
    %v1088 = vunpack.c.0.s8 %v1087
    %v1089 = vlaneseq
    %v1090 = vshrl.u32 %v1089, 7
    %v1091 = vsub.s32 %v1088, %v1090
    %v1092 = vrot.slane %v1078, %v1091
    %v1093 = vcombine.low %v1068, %v1076
    %v1094 = vcombine.high %v1068, %v1076
    %v1096 = vunpack.c.l.s4 1934713408
    %v1097 = vunpack.c.0.s8 %v1096
    %v1098 = vlaneseq
    %v1099 = vshrl.u32 %v1098, 7
    %v1100 = vsub.s32 %v1097, %v1099
    %v1101 = vrot.slane %v1093, %v1100
    %v1103 = vunpack.c.l.s4 1934713408
    %v1104 = vunpack.c.0.s8 %v1103
    %v1105 = vlaneseq
    %v1106 = vshrl.u32 %v1105, 7
    %v1107 = vsub.s32 %v1104, %v1106
    %v1108 = vrot.slane %v1094, %v1107
    %v1109 = vcombine.low %v1085, %v1101
    %v1110 = vcombine.high %v1085, %v1101
    %v1111 = vcombine.low %v1092, %v1108
    %v1112 = vcombine.high %v1092, %v1108
    %v1113 = vcombine.low %v1017, %v1024
    %v1115 = vunpack.c.l.s4 1983009808
    %v1116 = vunpack.c.0.s8 %v1115
    %v1117 = vlaneseq
    %v1118 = vshrl.u32 %v1117, 7
    %v1119 = vsub.s32 %v1116, %v1118
    %v1120 = vrot.slane %v1113, %v1119
    %v1121 = vcombine.low %v1041, %v1042
    %v1123 = vunpack.c.l.s4 1983009808
    %v1124 = vunpack.c.0.s8 %v1123
    %v1125 = vlaneseq
    %v1126 = vshrl.u32 %v1125, 7
    %v1127 = vsub.s32 %v1124, %v1126
    %v1128 = vrot.slane %v1121, %v1127
    %v1129 = vcombine.low %v1033, %v1040
    %v1131 = vunpack.c.l.s4 1983009808
    %v1132 = vunpack.c.0.s8 %v1131
    %v1133 = vlaneseq
    %v1134 = vshrl.u32 %v1133, 7
    %v1135 = vsub.s32 %v1132, %v1134
    %v1136 = vrot.slane %v1129, %v1135
    %v1137 = vcombine.low %v1043, %v1044
    %v1139 = vunpack.c.l.s4 1983009808
    %v1140 = vunpack.c.0.s8 %v1139
    %v1141 = vlaneseq
    %v1142 = vshrl.u32 %v1141, 7
    %v1143 = vsub.s32 %v1140, %v1142
    %v1144 = vrot.slane %v1137, %v1143
    %v1145 = vcombine.low %v1120, %v1128
    %v1146 = vcombine.high %v1120, %v1128
    %v1148 = vunpack.c.l.s4 1934713408
    %v1149 = vunpack.c.0.s8 %v1148
    %v1150 = vlaneseq
    %v1151 = vshrl.u32 %v1150, 7
    %v1152 = vsub.s32 %v1149, %v1151
    %v1153 = vrot.slane %v1145, %v1152
    %v1155 = vunpack.c.l.s4 1934713408
    %v1156 = vunpack.c.0.s8 %v1155
    %v1157 = vlaneseq
    %v1158 = vshrl.u32 %v1157, 7
    %v1159 = vsub.s32 %v1156, %v1158
    %v1160 = vrot.slane %v1146, %v1159
    %v1161 = vcombine.low %v1136, %v1144
    %v1162 = vcombine.high %v1136, %v1144
    %v1164 = vunpack.c.l.s4 1934713408
    %v1165 = vunpack.c.0.s8 %v1164
    %v1166 = vlaneseq
    %v1167 = vshrl.u32 %v1166, 7
    %v1168 = vsub.s32 %v1165, %v1167
    %v1169 = vrot.slane %v1161, %v1168
    %v1171 = vunpack.c.l.s4 1934713408
    %v1172 = vunpack.c.0.s8 %v1171
    %v1173 = vlaneseq
    %v1174 = vshrl.u32 %v1173, 7
    %v1175 = vsub.s32 %v1172, %v1174
    %v1176 = vrot.slane %v1162, %v1175
    %v1177 = vcombine.low %v1153, %v1169
    %v1178 = vcombine.high %v1153, %v1169
    %v1179 = vcombine.low %v1160, %v1176
    %v1180 = vcombine.high %v1160, %v1176
    %1183 = vrot.lane.b32.xlu0 %v1110, 8
    %v1184 = vpop.permute.xlu0 %1183
    %1185 = vrot.lane.b32.xlu0 %v1178, 8
    %v1186 = vpop.permute.xlu0 %1185
    %1191 = vrot.lane.b32.xlu0 %v1111, 16
    %v1192 = vpop.permute.xlu0 %1191
    %1193 = vrot.lane.b32.xlu0 %v1179, 16
    %v1194 = vpop.permute.xlu0 %1193
    %1199 = vrot.lane.b32.xlu0 %v1112, 24
    %v1200 = vpop.permute.xlu0 %1199
    %1201 = vrot.lane.b32.xlu0 %v1180, 24
    %v1202 = vpop.permute.xlu0 %1201
    %v1205 = vsel %vm447, %v1109, %v1184
    %v1206 = vsel %vm447, %v1177, %v1186
    %v1207 = vsel %vm640, %v1205, %v1192
    %v1208 = vsel %vm640, %v1206, %v1194
    %vm1209 = vcmask 195584
    %v1210 = vsel %vm1209, %v1207, %v1200
    %v1211 = vsel %vm1209, %v1208, %v1202
    %v1212 = vpack.c.bf16 %v1211, %v1210
    %v1217 = vunpack.c.l.b16 %v55
    %v1218 = vunpack.c.l.b16 %v56
    %v1219 = vunpack.c.l.b16 %v57
    %v1220 = vunpack.c.l.b16 %v58
    %v1221 = vpack.c.b16 %v1218, %v1217
    %v1222 = vpack.c.b16 %v1220, %v1219
    %vm1225 = vcmask 261120
    %v1227 = vsel %vm1225, %v1212, 0
    %1229 = vmatprep.subr.bf16.mxu0 0
    %1230 = vmatpush1.bf16.msra.mxu0 %v1221
    %1231 = vmatprep.subr.bf16.mxu0 0
    %1232 = vmatpush1.bf16.msra.mxu0 %v1222
    %1233 = vmatprep.subr.bf16.mxu0 0
    %1234 = vmatpush1.bf16.msra.mxu0 0
    %1235 = vmatprep.subr.bf16.mxu0 0
    %1236 = vmatpush1.bf16.msra.mxu0 0
    %1237 = vmatprep.subr.bf16.mxu0 0
    %1238 = vmatpush1.bf16.msra.mxu0 0
    %1239 = vmatprep.subr.bf16.mxu0 0
    %1240 = vmatpush1.bf16.msra.mxu0 0
    %1241 = vmatprep.subr.bf16.mxu0 0
    %1242 = vmatpush1.bf16.msra.mxu0 0
    %1243 = vmatprep.subr.bf16.mxu0 0
    %1244 = vmatpush1.bf16.msra.mxu0 0
    %1245 = vmatprep.subr.bf16.mxu0 0
    %1246 = vmatpush1.bf16.msra.mxu0 0
    %1247 = vmatprep.subr.bf16.mxu0 0
    %1248 = vmatpush1.bf16.msra.mxu0 0
    %1249 = vmatprep.subr.bf16.mxu0 0
    %1250 = vmatpush1.bf16.msra.mxu0 0
    %1251 = vmatprep.subr.bf16.mxu0 0
    %1252 = vmatpush1.bf16.msra.mxu0 0
    %1253 = vmatprep.subr.bf16.mxu0 0
    %1254 = vmatpush1.bf16.msra.mxu0 0
    %1255 = vmatprep.subr.bf16.mxu0 0
    %1256 = vmatpush1.bf16.msra.mxu0 0
    %1257 = vmatprep.subr.bf16.mxu0 0
    %1258 = vmatpush1.bf16.msra.mxu0 0
    %1259 = vmatprep.subr.bf16.mxu0 0
    %1260 = vmatpush1.bf16.msra.mxu0 0
    %1261 = vmatprep.mubr.bf16.mxu0 0
    %1262 = vmatmul.mubr.bf16.gmra.mrb[0].mxu0 %v1227
    %v1263 = vpop.f32.mrb[0].mxu0
    %v1264 = vadd.f32 0.0, %v1263
    %v1265 = vpop.f32.mrb[0].mxu0
    %v1266 = vpop.f32.mrb[0].mxu0
    %v1267 = vadd.f32 0.0, %v1266
    %v1268 = vpop.f32.mrb[0].mxu0
    %1269 = vdwg.mxu0
    %v1270 = vmul.f32 %v1264, %v30
    %v1271 = vmul.f32 %v1267, %v31
    %v1272 = vadd.f32 %v1270, %v28
    %v1273 = vadd.f32 %v1271, %v29
    %1274 = vadd.xlane.f32.xlu0 %v1272
    %v1275 = vpop.xlane.xlu0 %1274
    %1276 = vadd.xlane.f32.xlu0 %v1273
    %v1277 = vpop.xlane.xlu0 %1276
    %v1278 = vmul.f32 %v1275, 0.03125
    %v1279 = vmul.f32 %v1277, 0.03125
    %v1280 = vsub.f32 %v1272, %v1278
    %v1281 = vsub.f32 %v1273, %v1279
    %v1282 = vmul.f32 %v1280, %v38
    %v1283 = vmul.f32 %v1281, %v38
    %v1284 = vmul.f32 %v1282, %v1282
    %v1285 = vmul.f32 %v1283, %v1283
    %1286 = vadd.xlane.f32.xlu0 %v1284
    %v1287 = vpop.xlane.xlu0 %1286
    %1288 = vadd.xlane.f32.xlu0 %v1285
    %v1289 = vpop.xlane.xlu0 %1288
    %v1290 = vmul.f32 %v1287, 0.03125
    %v1291 = vmul.f32 %v1289, 0.03125
    %v1292 = vadd.f32 %v1290, 1e-05
    %v1293 = vadd.f32 %v1291, 1e-05
    %v1294 = vrsqrt.pop %v1292
    %v1295 = vrsqrt.pop %v1293
    %v1296 = vmul.f32 %v1282, %v1294
    %v1297 = vmul.f32 %v1283, %v1295
    %v1299 = vlaneseq
    %v1300 = vshrl.u32 %v1299, 7
    %v1301 = vsub.s32 0, %v1300
    %v1302 = vrot.slane %v59, %v1301
    %v1304 = vmul.f32 %v1296, %v1302
    %v1305 = vmul.f32 %v1297, %v1302
    %v1307 = vlaneseq
    %v1308 = vshrl.u32 %v1307, 7
    %v1309 = vsub.s32 0, %v1308
    %v1310 = vrot.slane %v60, %v1309
    %v1312 = vadd.f32 %v1304, %v1310
    %v1313 = vadd.f32 %v1305, %v1310
    %s1314 = scalar_lea.vmem %s3, 64
    %v1315 = vld [vmem:[%s1314] sm:$0xf]
    %v1316 = vld [vmem:[%s1314 + $0x4] sm:$0xf]
    %v1317 = vld [vmem:[%s1314 + $0x8] sm:$0xf]
    %v1318 = vld [vmem:[%s1314 + $0xc] sm:$0xf]
    %v1319 = vld [vmem:[%s1314 + $0x10] sm:$0xf]
    %v1320 = vld [vmem:[%s1314 + $0x14] sm:$0xf]
    %v1321 = vld [vmem:[%s1314 + $0x18] sm:$0xf]
    %v1322 = vld [vmem:[%s1314 + $0x1c] sm:$0xf]
    %v1323 = vld [vmem:[%s1314 + $0x20] sm:$0xf]
    %v1324 = vld [vmem:[%s1314 + $0x24] sm:$0xf]
    %v1325 = vld [vmem:[%s1314 + $0x28] sm:$0xf]
    %v1326 = vld [vmem:[%s1314 + $0x2c] sm:$0xf]
    %v1327 = vld [vmem:[%s1314 + $0x30] sm:$0xf]
    %v1328 = vld [vmem:[%s1314 + $0x34] sm:$0xf]
    %v1329 = vld [vmem:[%s1314 + $0x38] sm:$0xf]
    %v1330 = vld [vmem:[%s1314 + $0x3c] sm:$0xf]
    %s1331 = scalar_lea.vmem %s4, 16
    %v1332 = vld [vmem:[%s1331] sm:$0xf]
    %v1333 = vld [vmem:[%s1331 + $0x4] sm:$0xf]
    %v1334 = vld [vmem:[%s1331 + $0x8] sm:$0xf]
    %v1335 = vld [vmem:[%s1331 + $0xc] sm:$0xf]
    %s1336 = scalar_lea.vmem %s5, 1
    %v1337 = vld [vmem:[%s1336] sm:$0x1]
    %s1338 = scalar_lea.vmem %s6, 1
    %v1339 = vld [vmem:[%s1338] sm:$0x1]
    %v1340 = vpack.c.bf16 %v1313, %v1312
    %v1357 = vunpack.c.l.b16 %v1315
    %v1358 = vunpack.c.l.b16 %v1316
    %v1359 = vunpack.c.l.b16 %v1317
    %v1360 = vunpack.c.l.b16 %v1318
    %v1361 = vunpack.c.l.b16 %v1319
    %v1362 = vunpack.c.l.b16 %v1320
    %v1363 = vunpack.c.l.b16 %v1321
    %v1364 = vunpack.c.l.b16 %v1322
    %v1365 = vunpack.c.l.b16 %v1323
    %v1366 = vunpack.c.l.b16 %v1324
    %v1367 = vunpack.c.l.b16 %v1325
    %v1368 = vunpack.c.l.b16 %v1326
    %v1369 = vunpack.c.l.b16 %v1327
    %v1370 = vunpack.c.l.b16 %v1328
    %v1371 = vunpack.c.l.b16 %v1329
    %v1372 = vunpack.c.l.b16 %v1330
    %v1373 = vpack.c.b16 %v1358, %v1357
    %v1374 = vpack.c.b16 %v1360, %v1359
    %v1375 = vpack.c.b16 %v1362, %v1361
    %v1376 = vpack.c.b16 %v1364, %v1363
    %v1377 = vpack.c.b16 %v1366, %v1365
    %v1378 = vpack.c.b16 %v1368, %v1367
    %v1379 = vpack.c.b16 %v1370, %v1369
    %v1380 = vpack.c.b16 %v1372, %v1371
    %1389 = vmatprep.subr.bf16.mxu0 0
    %1390 = vmatpush1.bf16.msra.mxu0 %v1373
    %1391 = vmatprep.subr.bf16.mxu0 0
    %1392 = vmatpush1.bf16.msra.mxu0 %v1374
    %1393 = vmatprep.subr.bf16.mxu0 0
    %1394 = vmatpush1.bf16.msra.mxu0 %v1375
    %1395 = vmatprep.subr.bf16.mxu0 0
    %1396 = vmatpush1.bf16.msra.mxu0 %v1376
    %1397 = vmatprep.subr.bf16.mxu0 0
    %1398 = vmatpush1.bf16.msra.mxu0 %v1377
    %1399 = vmatprep.subr.bf16.mxu0 0
    %1400 = vmatpush1.bf16.msra.mxu0 %v1378
    %1401 = vmatprep.subr.bf16.mxu0 0
    %1402 = vmatpush1.bf16.msra.mxu0 %v1379
    %1403 = vmatprep.subr.bf16.mxu0 0
    %1404 = vmatpush1.bf16.msra.mxu0 %v1380
    %1405 = vmatprep.subr.bf16.mxu0 0
    %1406 = vmatpush1.bf16.msra.mxu0 0
    %1407 = vmatprep.subr.bf16.mxu0 0
    %1408 = vmatpush1.bf16.msra.mxu0 0
    %1409 = vmatprep.subr.bf16.mxu0 0
    %1410 = vmatpush1.bf16.msra.mxu0 0
    %1411 = vmatprep.subr.bf16.mxu0 0
    %1412 = vmatpush1.bf16.msra.mxu0 0
    %1413 = vmatprep.subr.bf16.mxu0 0
    %1414 = vmatpush1.bf16.msra.mxu0 0
    %1415 = vmatprep.subr.bf16.mxu0 0
    %1416 = vmatpush1.bf16.msra.mxu0 0
    %1417 = vmatprep.subr.bf16.mxu0 0
    %1418 = vmatpush1.bf16.msra.mxu0 0
    %1419 = vmatprep.subr.bf16.mxu0 0
    %1420 = vmatpush1.bf16.msra.mxu0 0
    %1421 = vmatprep.mubr.bf16.mxu0 0
    %1422 = vmatmul.mubr.bf16.gmra.mrb[0].mxu0 %v1340
    %v1423 = vpop.f32.mrb[0].mxu0
    %v1424 = vadd.f32 0.0, %v1423
    %v1425 = vpop.f32.mrb[0].mxu0
    %v1426 = vpop.f32.mrb[0].mxu0
    %v1427 = vadd.f32 0.0, %v1426
    %v1428 = vpop.f32.mrb[0].mxu0
    %1429 = vdwg.mxu0
    %1432 = vrot.lane.b32.xlu0 %v1424, 120
    %v1433 = vpop.permute.xlu0 %1432
    %1434 = vrot.lane.b32.xlu0 %v1427, 120
    %v1435 = vpop.permute.xlu0 %1434
    %1438 = vrot.lane.b32.xlu0 %v1424, 112
    %v1439 = vpop.permute.xlu0 %1438
    %1440 = vrot.lane.b32.xlu0 %v1427, 112
    %v1441 = vpop.permute.xlu0 %1440
    %1444 = vrot.lane.b32.xlu0 %v1424, 104
    %v1445 = vpop.permute.xlu0 %1444
    %1446 = vrot.lane.b32.xlu0 %v1427, 104
    %v1447 = vpop.permute.xlu0 %1446
    %v1450 = vcombine.low %v1424, %v1439
    %v1451 = vcombine.high %v1424, %v1439
    %v1453 = vunpack.c.l.s4 1983009808
    %v1454 = vunpack.c.0.s8 %v1453
    %v1455 = vlaneseq
    %v1456 = vshrl.u32 %v1455, 7
    %v1457 = vsub.s32 %v1454, %v1456
    %v1458 = vrot.slane %v1450, %v1457
    %v1460 = vunpack.c.l.s4 1983009808
    %v1461 = vunpack.c.0.s8 %v1460
    %v1462 = vlaneseq
    %v1463 = vshrl.u32 %v1462, 7
    %v1464 = vsub.s32 %v1461, %v1463
    %v1465 = vrot.slane %v1451, %v1464
    %v1466 = vcombine.low %v1433, %v1445
    %v1467 = vcombine.high %v1433, %v1445
    %v1469 = vunpack.c.l.s4 1983009808
    %v1470 = vunpack.c.0.s8 %v1469
    %v1471 = vlaneseq
    %v1472 = vshrl.u32 %v1471, 7
    %v1473 = vsub.s32 %v1470, %v1472
    %v1474 = vrot.slane %v1466, %v1473
    %v1476 = vunpack.c.l.s4 1983009808
    %v1477 = vunpack.c.0.s8 %v1476
    %v1478 = vlaneseq
    %v1479 = vshrl.u32 %v1478, 7
    %v1480 = vsub.s32 %v1477, %v1479
    %v1481 = vrot.slane %v1467, %v1480
    %v1482 = vcombine.low %v1458, %v1474
    %v1483 = vcombine.high %v1458, %v1474
    %v1485 = vunpack.c.l.s4 1934713408
    %v1486 = vunpack.c.0.s8 %v1485
    %v1487 = vlaneseq
    %v1488 = vshrl.u32 %v1487, 7
    %v1489 = vsub.s32 %v1486, %v1488
    %v1490 = vrot.slane %v1482, %v1489
    %v1492 = vunpack.c.l.s4 1934713408
    %v1493 = vunpack.c.0.s8 %v1492
    %v1494 = vlaneseq
    %v1495 = vshrl.u32 %v1494, 7
    %v1496 = vsub.s32 %v1493, %v1495
    %v1497 = vrot.slane %v1483, %v1496
    %v1498 = vcombine.low %v1465, %v1481
    %v1499 = vcombine.high %v1465, %v1481
    %v1501 = vunpack.c.l.s4 1934713408
    %v1502 = vunpack.c.0.s8 %v1501
    %v1503 = vlaneseq
    %v1504 = vshrl.u32 %v1503, 7
    %v1505 = vsub.s32 %v1502, %v1504
    %v1506 = vrot.slane %v1498, %v1505
    %v1508 = vunpack.c.l.s4 1934713408
    %v1509 = vunpack.c.0.s8 %v1508
    %v1510 = vlaneseq
    %v1511 = vshrl.u32 %v1510, 7
    %v1512 = vsub.s32 %v1509, %v1511
    %v1513 = vrot.slane %v1499, %v1512
    %v1514 = vcombine.high %v1490, 0.0
    %v1515 = vcombine.high %v1497, 0.0
    %v1516 = vcombine.high %v1506, 0.0
    %v1517 = vcombine.high %v1513, 0.0
    %v1518 = vcombine.low %v1427, %v1441
    %v1519 = vcombine.high %v1427, %v1441
    %v1521 = vunpack.c.l.s4 1983009808
    %v1522 = vunpack.c.0.s8 %v1521
    %v1523 = vlaneseq
    %v1524 = vshrl.u32 %v1523, 7
    %v1525 = vsub.s32 %v1522, %v1524
    %v1526 = vrot.slane %v1518, %v1525
    %v1528 = vunpack.c.l.s4 1983009808
    %v1529 = vunpack.c.0.s8 %v1528
    %v1530 = vlaneseq
    %v1531 = vshrl.u32 %v1530, 7
    %v1532 = vsub.s32 %v1529, %v1531
    %v1533 = vrot.slane %v1519, %v1532
    %v1534 = vcombine.low %v1435, %v1447
    %v1535 = vcombine.high %v1435, %v1447
    %v1537 = vunpack.c.l.s4 1983009808
    %v1538 = vunpack.c.0.s8 %v1537
    %v1539 = vlaneseq
    %v1540 = vshrl.u32 %v1539, 7
    %v1541 = vsub.s32 %v1538, %v1540
    %v1542 = vrot.slane %v1534, %v1541
    %v1544 = vunpack.c.l.s4 1983009808
    %v1545 = vunpack.c.0.s8 %v1544
    %v1546 = vlaneseq
    %v1547 = vshrl.u32 %v1546, 7
    %v1548 = vsub.s32 %v1545, %v1547
    %v1549 = vrot.slane %v1535, %v1548
    %v1550 = vcombine.low %v1526, %v1542
    %v1551 = vcombine.high %v1526, %v1542
    %v1553 = vunpack.c.l.s4 1934713408
    %v1554 = vunpack.c.0.s8 %v1553
    %v1555 = vlaneseq
    %v1556 = vshrl.u32 %v1555, 7
    %v1557 = vsub.s32 %v1554, %v1556
    %v1558 = vrot.slane %v1550, %v1557
    %v1560 = vunpack.c.l.s4 1934713408
    %v1561 = vunpack.c.0.s8 %v1560
    %v1562 = vlaneseq
    %v1563 = vshrl.u32 %v1562, 7
    %v1564 = vsub.s32 %v1561, %v1563
    %v1565 = vrot.slane %v1551, %v1564
    %v1566 = vcombine.low %v1533, %v1549
    %v1567 = vcombine.high %v1533, %v1549
    %v1569 = vunpack.c.l.s4 1934713408
    %v1570 = vunpack.c.0.s8 %v1569
    %v1571 = vlaneseq
    %v1572 = vshrl.u32 %v1571, 7
    %v1573 = vsub.s32 %v1570, %v1572
    %v1574 = vrot.slane %v1566, %v1573
    %v1576 = vunpack.c.l.s4 1934713408
    %v1577 = vunpack.c.0.s8 %v1576
    %v1578 = vlaneseq
    %v1579 = vshrl.u32 %v1578, 7
    %v1580 = vsub.s32 %v1577, %v1579
    %v1581 = vrot.slane %v1567, %v1580
    %v1582 = vcombine.high %v1558, 0.0
    %v1583 = vcombine.high %v1565, 0.0
    %v1584 = vcombine.high %v1574, 0.0
    %v1585 = vcombine.high %v1581, 0.0
    %v1586 = vcombine.low %v1490, %v1497
    %v1588 = vunpack.c.l.s4 1983009808
    %v1589 = vunpack.c.0.s8 %v1588
    %v1590 = vlaneseq
    %v1591 = vshrl.u32 %v1590, 7
    %v1592 = vsub.s32 %v1589, %v1591
    %v1593 = vrot.slane %v1586, %v1592
    %v1594 = vcombine.low %v1514, %v1515
    %v1596 = vunpack.c.l.s4 1983009808
    %v1597 = vunpack.c.0.s8 %v1596
    %v1598 = vlaneseq
    %v1599 = vshrl.u32 %v1598, 7
    %v1600 = vsub.s32 %v1597, %v1599
    %v1601 = vrot.slane %v1594, %v1600
    %v1602 = vcombine.low %v1506, %v1513
    %v1604 = vunpack.c.l.s4 1983009808
    %v1605 = vunpack.c.0.s8 %v1604
    %v1606 = vlaneseq
    %v1607 = vshrl.u32 %v1606, 7
    %v1608 = vsub.s32 %v1605, %v1607
    %v1609 = vrot.slane %v1602, %v1608
    %v1610 = vcombine.low %v1516, %v1517
    %v1612 = vunpack.c.l.s4 1983009808
    %v1613 = vunpack.c.0.s8 %v1612
    %v1614 = vlaneseq
    %v1615 = vshrl.u32 %v1614, 7
    %v1616 = vsub.s32 %v1613, %v1615
    %v1617 = vrot.slane %v1610, %v1616
    %v1618 = vcombine.low %v1593, %v1601
    %v1619 = vcombine.high %v1593, %v1601
    %v1621 = vunpack.c.l.s4 1934713408
    %v1622 = vunpack.c.0.s8 %v1621
    %v1623 = vlaneseq
    %v1624 = vshrl.u32 %v1623, 7
    %v1625 = vsub.s32 %v1622, %v1624
    %v1626 = vrot.slane %v1618, %v1625
    %v1628 = vunpack.c.l.s4 1934713408
    %v1629 = vunpack.c.0.s8 %v1628
    %v1630 = vlaneseq
    %v1631 = vshrl.u32 %v1630, 7
    %v1632 = vsub.s32 %v1629, %v1631
    %v1633 = vrot.slane %v1619, %v1632
    %v1634 = vcombine.low %v1609, %v1617
    %v1635 = vcombine.high %v1609, %v1617
    %v1637 = vunpack.c.l.s4 1934713408
    %v1638 = vunpack.c.0.s8 %v1637
    %v1639 = vlaneseq
    %v1640 = vshrl.u32 %v1639, 7
    %v1641 = vsub.s32 %v1638, %v1640
    %v1642 = vrot.slane %v1634, %v1641
    %v1644 = vunpack.c.l.s4 1934713408
    %v1645 = vunpack.c.0.s8 %v1644
    %v1646 = vlaneseq
    %v1647 = vshrl.u32 %v1646, 7
    %v1648 = vsub.s32 %v1645, %v1647
    %v1649 = vrot.slane %v1635, %v1648
    %v1650 = vcombine.low %v1626, %v1642
    %v1651 = vcombine.high %v1626, %v1642
    %v1652 = vcombine.low %v1633, %v1649
    %v1653 = vcombine.high %v1633, %v1649
    %v1654 = vcombine.low %v1558, %v1565
    %v1656 = vunpack.c.l.s4 1983009808
    %v1657 = vunpack.c.0.s8 %v1656
    %v1658 = vlaneseq
    %v1659 = vshrl.u32 %v1658, 7
    %v1660 = vsub.s32 %v1657, %v1659
    %v1661 = vrot.slane %v1654, %v1660
    %v1662 = vcombine.low %v1582, %v1583
    %v1664 = vunpack.c.l.s4 1983009808
    %v1665 = vunpack.c.0.s8 %v1664
    %v1666 = vlaneseq
    %v1667 = vshrl.u32 %v1666, 7
    %v1668 = vsub.s32 %v1665, %v1667
    %v1669 = vrot.slane %v1662, %v1668
    %v1670 = vcombine.low %v1574, %v1581
    %v1672 = vunpack.c.l.s4 1983009808
    %v1673 = vunpack.c.0.s8 %v1672
    %v1674 = vlaneseq
    %v1675 = vshrl.u32 %v1674, 7
    %v1676 = vsub.s32 %v1673, %v1675
    %v1677 = vrot.slane %v1670, %v1676
    %v1678 = vcombine.low %v1584, %v1585
    %v1680 = vunpack.c.l.s4 1983009808
    %v1681 = vunpack.c.0.s8 %v1680
    %v1682 = vlaneseq
    %v1683 = vshrl.u32 %v1682, 7
    %v1684 = vsub.s32 %v1681, %v1683
    %v1685 = vrot.slane %v1678, %v1684
    %v1686 = vcombine.low %v1661, %v1669
    %v1687 = vcombine.high %v1661, %v1669
    %v1689 = vunpack.c.l.s4 1934713408
    %v1690 = vunpack.c.0.s8 %v1689
    %v1691 = vlaneseq
    %v1692 = vshrl.u32 %v1691, 7
    %v1693 = vsub.s32 %v1690, %v1692
    %v1694 = vrot.slane %v1686, %v1693
    %v1696 = vunpack.c.l.s4 1934713408
    %v1697 = vunpack.c.0.s8 %v1696
    %v1698 = vlaneseq
    %v1699 = vshrl.u32 %v1698, 7
    %v1700 = vsub.s32 %v1697, %v1699
    %v1701 = vrot.slane %v1687, %v1700
    %v1702 = vcombine.low %v1677, %v1685
    %v1703 = vcombine.high %v1677, %v1685
    %v1705 = vunpack.c.l.s4 1934713408
    %v1706 = vunpack.c.0.s8 %v1705
    %v1707 = vlaneseq
    %v1708 = vshrl.u32 %v1707, 7
    %v1709 = vsub.s32 %v1706, %v1708
    %v1710 = vrot.slane %v1702, %v1709
    %v1712 = vunpack.c.l.s4 1934713408
    %v1713 = vunpack.c.0.s8 %v1712
    %v1714 = vlaneseq
    %v1715 = vshrl.u32 %v1714, 7
    %v1716 = vsub.s32 %v1713, %v1715
    %v1717 = vrot.slane %v1703, %v1716
    %v1718 = vcombine.low %v1694, %v1710
    %v1719 = vcombine.high %v1694, %v1710
    %v1720 = vcombine.low %v1701, %v1717
    %v1721 = vcombine.high %v1701, %v1717
    %v1722 = vpack.c.bf16 %v1718, %v1650
    %v1723 = vpack.c.bf16 %v1719, %v1651
    %v1724 = vpack.c.bf16 %v1720, %v1652
    %v1725 = vpack.c.bf16 %v1721, %v1653
    %v1727 = vsel %vm447, %v1722, 0
    %1729 = vmatprep.subr.bf16.mxu0 0
    %1730 = vmatpush1.bf16.xpose.msra.mxu0 %v1727
    %1731 = vmatprep.subr.bf16.mxu0 0
    %1732 = vmatpush1.bf16.xpose.msra.mxu0 0
    %1733 = vmatprep.subr.bf16.mxu0 0
    %1734 = vmatpush1.bf16.xpose.msra.mxu0 0
    %1735 = vmatprep.subr.bf16.mxu0 0
    %1736 = vmatpush1.bf16.xpose.msra.mxu0 0
    %1737 = vmatprep.subr.bf16.mxu0 0
    %1738 = vmatpush1.bf16.xpose.msra.mxu0 0
    %1739 = vmatprep.subr.bf16.mxu0 0
    %1740 = vmatpush1.bf16.xpose.msra.mxu0 0
    %1741 = vmatprep.subr.bf16.mxu0 0
    %1742 = vmatpush1.bf16.xpose.msra.mxu0 0
    %1743 = vmatprep.subr.bf16.mxu0 0
    %1744 = vmatpush1.bf16.xpose.msra.mxu0 0
    %1745 = vmatprep.subr.bf16.mxu0 0
    %1746 = vmatpush1.bf16.xpose.msra.mxu0 0
    %1747 = vmatprep.subr.bf16.mxu0 0
    %1748 = vmatpush1.bf16.xpose.msra.mxu0 0
    %1749 = vmatprep.subr.bf16.mxu0 0
    %1750 = vmatpush1.bf16.xpose.msra.mxu0 0
    %1751 = vmatprep.subr.bf16.mxu0 0
    %1752 = vmatpush1.bf16.xpose.msra.mxu0 0
    %1753 = vmatprep.subr.bf16.mxu0 0
    %1754 = vmatpush1.bf16.xpose.msra.mxu0 0
    %1755 = vmatprep.subr.bf16.mxu0 0
    %1756 = vmatpush1.bf16.xpose.msra.mxu0 0
    %1757 = vmatprep.subr.bf16.mxu0 0
    %1758 = vmatpush1.bf16.xpose.msra.mxu0 0
    %1759 = vmatprep.subr.bf16.mxu0 0
    %1760 = vmatpush1.bf16.xpose.msra.mxu0 0
    %1761 = vmatprep.mubr.bf16.mxu0 0
    %1762 = vmatmul.mubr.bf16.gmra.mrb[0].mxu0 %v1727
    %v1763 = vpop.f32.mrb[0].mxu0
    %v1764 = vadd.f32 0.0, %v1763
    %v1765 = vpop.f32.mrb[0].mxu0
    %v1766 = vpop.f32.mrb[0].mxu0
    %v1767 = vadd.f32 0.0, %v1766
    %v1768 = vpop.f32.mrb[0].mxu0
    %1769 = vdwg.mxu0
    %v1771 = vsel %vm447, %v1723, 0
    %1773 = vmatprep.subr.bf16.mxu0 0
    %1774 = vmatpush1.bf16.xpose.msra.mxu0 %v1771
    %1775 = vmatprep.subr.bf16.mxu0 0
    %1776 = vmatpush1.bf16.xpose.msra.mxu0 0
    %1777 = vmatprep.subr.bf16.mxu0 0
    %1778 = vmatpush1.bf16.xpose.msra.mxu0 0
    %1779 = vmatprep.subr.bf16.mxu0 0
    %1780 = vmatpush1.bf16.xpose.msra.mxu0 0
    %1781 = vmatprep.subr.bf16.mxu0 0
    %1782 = vmatpush1.bf16.xpose.msra.mxu0 0
    %1783 = vmatprep.subr.bf16.mxu0 0
    %1784 = vmatpush1.bf16.xpose.msra.mxu0 0
    %1785 = vmatprep.subr.bf16.mxu0 0
    %1786 = vmatpush1.bf16.xpose.msra.mxu0 0
    %1787 = vmatprep.subr.bf16.mxu0 0
    %1788 = vmatpush1.bf16.xpose.msra.mxu0 0
    %1789 = vmatprep.subr.bf16.mxu0 0
    %1790 = vmatpush1.bf16.xpose.msra.mxu0 0
    %1791 = vmatprep.subr.bf16.mxu0 0
    %1792 = vmatpush1.bf16.xpose.msra.mxu0 0
    %1793 = vmatprep.subr.bf16.mxu0 0
    %1794 = vmatpush1.bf16.xpose.msra.mxu0 0
    %1795 = vmatprep.subr.bf16.mxu0 0
    %1796 = vmatpush1.bf16.xpose.msra.mxu0 0
    %1797 = vmatprep.subr.bf16.mxu0 0
    %1798 = vmatpush1.bf16.xpose.msra.mxu0 0
    %1799 = vmatprep.subr.bf16.mxu0 0
    %1800 = vmatpush1.bf16.xpose.msra.mxu0 0
    %1801 = vmatprep.subr.bf16.mxu0 0
    %1802 = vmatpush1.bf16.xpose.msra.mxu0 0
    %1803 = vmatprep.subr.bf16.mxu0 0
    %1804 = vmatpush1.bf16.xpose.msra.mxu0 0
    %1805 = vmatprep.mubr.bf16.mxu0 0
    %1806 = vmatmul.mubr.bf16.gmra.mrb[0].mxu0 %v1771
    %v1807 = vpop.f32.mrb[0].mxu0
    %v1808 = vadd.f32 0.0, %v1807
    %v1809 = vpop.f32.mrb[0].mxu0
    %v1810 = vpop.f32.mrb[0].mxu0
    %v1811 = vadd.f32 0.0, %v1810
    %v1812 = vpop.f32.mrb[0].mxu0
    %1813 = vdwg.mxu0
    %v1815 = vsel %vm447, %v1724, 0
    %1817 = vmatprep.subr.bf16.mxu0 0
    %1818 = vmatpush1.bf16.xpose.msra.mxu0 %v1815
    %1819 = vmatprep.subr.bf16.mxu0 0
    %1820 = vmatpush1.bf16.xpose.msra.mxu0 0
    %1821 = vmatprep.subr.bf16.mxu0 0
    %1822 = vmatpush1.bf16.xpose.msra.mxu0 0
    %1823 = vmatprep.subr.bf16.mxu0 0
    %1824 = vmatpush1.bf16.xpose.msra.mxu0 0
    %1825 = vmatprep.subr.bf16.mxu0 0
    %1826 = vmatpush1.bf16.xpose.msra.mxu0 0
    %1827 = vmatprep.subr.bf16.mxu0 0
    %1828 = vmatpush1.bf16.xpose.msra.mxu0 0
    %1829 = vmatprep.subr.bf16.mxu0 0
    %1830 = vmatpush1.bf16.xpose.msra.mxu0 0
    %1831 = vmatprep.subr.bf16.mxu0 0
    %1832 = vmatpush1.bf16.xpose.msra.mxu0 0
    %1833 = vmatprep.subr.bf16.mxu0 0
    %1834 = vmatpush1.bf16.xpose.msra.mxu0 0
    %1835 = vmatprep.subr.bf16.mxu0 0
    %1836 = vmatpush1.bf16.xpose.msra.mxu0 0
    %1837 = vmatprep.subr.bf16.mxu0 0
    %1838 = vmatpush1.bf16.xpose.msra.mxu0 0
    %1839 = vmatprep.subr.bf16.mxu0 0
    %1840 = vmatpush1.bf16.xpose.msra.mxu0 0
    %1841 = vmatprep.subr.bf16.mxu0 0
    %1842 = vmatpush1.bf16.xpose.msra.mxu0 0
    %1843 = vmatprep.subr.bf16.mxu0 0
    %1844 = vmatpush1.bf16.xpose.msra.mxu0 0
    %1845 = vmatprep.subr.bf16.mxu0 0
    %1846 = vmatpush1.bf16.xpose.msra.mxu0 0
    %1847 = vmatprep.subr.bf16.mxu0 0
    %1848 = vmatpush1.bf16.xpose.msra.mxu0 0
    %1849 = vmatprep.mubr.bf16.mxu0 0
    %1850 = vmatmul.mubr.bf16.gmra.mrb[0].mxu0 %v1815
    %v1851 = vpop.f32.mrb[0].mxu0
    %v1852 = vadd.f32 0.0, %v1851
    %v1853 = vpop.f32.mrb[0].mxu0
    %v1854 = vpop.f32.mrb[0].mxu0
    %v1855 = vadd.f32 0.0, %v1854
    %v1856 = vpop.f32.mrb[0].mxu0
    %1857 = vdwg.mxu0
    %v1859 = vsel %vm447, %v1725, 0
    %1861 = vmatprep.subr.bf16.mxu0 0
    %1862 = vmatpush1.bf16.xpose.msra.mxu0 %v1859
    %1863 = vmatprep.subr.bf16.mxu0 0
    %1864 = vmatpush1.bf16.xpose.msra.mxu0 0
    %1865 = vmatprep.subr.bf16.mxu0 0
    %1866 = vmatpush1.bf16.xpose.msra.mxu0 0
    %1867 = vmatprep.subr.bf16.mxu0 0
    %1868 = vmatpush1.bf16.xpose.msra.mxu0 0
    %1869 = vmatprep.subr.bf16.mxu0 0
    %1870 = vmatpush1.bf16.xpose.msra.mxu0 0
    %1871 = vmatprep.subr.bf16.mxu0 0
    %1872 = vmatpush1.bf16.xpose.msra.mxu0 0
    %1873 = vmatprep.subr.bf16.mxu0 0
    %1874 = vmatpush1.bf16.xpose.msra.mxu0 0
    %1875 = vmatprep.subr.bf16.mxu0 0
    %1876 = vmatpush1.bf16.xpose.msra.mxu0 0
    %1877 = vmatprep.subr.bf16.mxu0 0
    %1878 = vmatpush1.bf16.xpose.msra.mxu0 0
    %1879 = vmatprep.subr.bf16.mxu0 0
    %1880 = vmatpush1.bf16.xpose.msra.mxu0 0
    %1881 = vmatprep.subr.bf16.mxu0 0
    %1882 = vmatpush1.bf16.xpose.msra.mxu0 0
    %1883 = vmatprep.subr.bf16.mxu0 0
    %1884 = vmatpush1.bf16.xpose.msra.mxu0 0
    %1885 = vmatprep.subr.bf16.mxu0 0
    %1886 = vmatpush1.bf16.xpose.msra.mxu0 0
    %1887 = vmatprep.subr.bf16.mxu0 0
    %1888 = vmatpush1.bf16.xpose.msra.mxu0 0
    %1889 = vmatprep.subr.bf16.mxu0 0
    %1890 = vmatpush1.bf16.xpose.msra.mxu0 0
    %1891 = vmatprep.subr.bf16.mxu0 0
    %1892 = vmatpush1.bf16.xpose.msra.mxu0 0
    %1893 = vmatprep.mubr.bf16.mxu0 0
    %1894 = vmatmul.mubr.bf16.gmra.mrb[0].mxu0 %v1859
    %v1895 = vpop.f32.mrb[0].mxu0
    %v1896 = vadd.f32 0.0, %v1895
    %v1897 = vpop.f32.mrb[0].mxu0
    %v1898 = vpop.f32.mrb[0].mxu0
    %v1899 = vadd.f32 0.0, %v1898
    %v1900 = vpop.f32.mrb[0].mxu0
    %1901 = vdwg.mxu0
    %v1902 = vmul.f32 %v1764, 0.35355338
    %v1903 = vmul.f32 %v1767, 0.35355338
    %v1904 = vmul.f32 %v1808, 0.35355338
    %v1905 = vmul.f32 %v1811, 0.35355338
    %v1906 = vmul.f32 %v1852, 0.35355338
    %v1907 = vmul.f32 %v1855, 0.35355338
    %v1908 = vmul.f32 %v1896, 0.35355338
    %v1909 = vmul.f32 %v1899, 0.35355338
    %v1910 = vadd.f32 %v1902, %v32
    %v1911 = vadd.f32 %v1903, %v33
    %v1912 = vadd.f32 %v1904, %v32
    %v1913 = vadd.f32 %v1905, %v33
    %v1914 = vadd.f32 %v1906, %v32
    %v1915 = vadd.f32 %v1907, %v33
    %v1916 = vadd.f32 %v1908, %v32
    %v1917 = vadd.f32 %v1909, %v33
    %v1918 = vsel %vm640, %v1910, -inf
    %1919 = vmax.xlane.f32.xlu0 %v1918
    %v1920 = vpop.xlane.xlu0 %1919
    %v1921 = vsel %vm640, %v1911, -inf
    %1922 = vmax.xlane.f32.xlu0 %v1921
    %v1923 = vpop.xlane.xlu0 %1922
    %v1924 = vsel %vm640, %v1912, -inf
    %1925 = vmax.xlane.f32.xlu0 %v1924
    %v1926 = vpop.xlane.xlu0 %1925
    %v1927 = vsel %vm640, %v1913, -inf
    %1928 = vmax.xlane.f32.xlu0 %v1927
    %v1929 = vpop.xlane.xlu0 %1928
    %v1930 = vsel %vm640, %v1914, -inf
    %1931 = vmax.xlane.f32.xlu0 %v1930
    %v1932 = vpop.xlane.xlu0 %1931
    %v1933 = vsel %vm640, %v1915, -inf
    %1934 = vmax.xlane.f32.xlu0 %v1933
    %v1935 = vpop.xlane.xlu0 %1934
    %v1936 = vsel %vm640, %v1916, -inf
    %1937 = vmax.xlane.f32.xlu0 %v1936
    %v1938 = vpop.xlane.xlu0 %1937
    %v1939 = vsel %vm640, %v1917, -inf
    %1940 = vmax.xlane.f32.xlu0 %v1939
    %v1941 = vpop.xlane.xlu0 %1940
    %v1942 = vsub.f32 %v1910, %v1920
    %v1943 = vsub.f32 %v1911, %v1923
    %v1944 = vsub.f32 %v1912, %v1926
    %v1945 = vsub.f32 %v1913, %v1929
    %v1946 = vsub.f32 %v1914, %v1932
    %v1947 = vsub.f32 %v1915, %v1935
    %v1948 = vsub.f32 %v1916, %v1938
    %v1949 = vsub.f32 %v1917, %v1941
    %v1950 = vmul.f32 %v1942, 1.442695
    %v1951 = vpow.pop %v1950
    %v1952 = vmul.f32 %v1943, 1.442695
    %v1953 = vpow.pop %v1952
    %v1954 = vmul.f32 %v1944, 1.442695
    %v1955 = vpow.pop %v1954
    %v1956 = vmul.f32 %v1945, 1.442695
    %v1957 = vpow.pop %v1956
    %v1958 = vmul.f32 %v1946, 1.442695
    %v1959 = vpow.pop %v1958
    %v1960 = vmul.f32 %v1947, 1.442695
    %v1961 = vpow.pop %v1960
    %v1962 = vmul.f32 %v1948, 1.442695
    %v1963 = vpow.pop %v1962
    %v1964 = vmul.f32 %v1949, 1.442695
    %v1965 = vpow.pop %v1964
    %v1966 = vsel %vm640, %v1951, 0.0
    %1967 = vadd.xlane.f32.xlu0 %v1966
    %v1968 = vpop.xlane.xlu0 %1967
    %v1969 = vsel %vm640, %v1953, 0.0
    %1970 = vadd.xlane.f32.xlu0 %v1969
    %v1971 = vpop.xlane.xlu0 %1970
    %v1972 = vsel %vm640, %v1955, 0.0
    %1973 = vadd.xlane.f32.xlu0 %v1972
    %v1974 = vpop.xlane.xlu0 %1973
    %v1975 = vsel %vm640, %v1957, 0.0
    %1976 = vadd.xlane.f32.xlu0 %v1975
    %v1977 = vpop.xlane.xlu0 %1976
    %v1978 = vsel %vm640, %v1959, 0.0
    %1979 = vadd.xlane.f32.xlu0 %v1978
    %v1980 = vpop.xlane.xlu0 %1979
    %v1981 = vsel %vm640, %v1961, 0.0
    %1982 = vadd.xlane.f32.xlu0 %v1981
    %v1983 = vpop.xlane.xlu0 %1982
    %v1984 = vsel %vm640, %v1963, 0.0
    %1985 = vadd.xlane.f32.xlu0 %v1984
    %v1986 = vpop.xlane.xlu0 %1985
    %v1987 = vsel %vm640, %v1965, 0.0
    %1988 = vadd.xlane.f32.xlu0 %v1987
    %v1989 = vpop.xlane.xlu0 %1988
    %v1990 = vrcp.pop %v1968
    %v1991 = vrcp.pop %v1971
    %v1992 = vrcp.pop %v1974
    %v1993 = vrcp.pop %v1977
    %v1994 = vrcp.pop %v1980
    %v1995 = vrcp.pop %v1983
    %v1996 = vrcp.pop %v1986
    %v1997 = vrcp.pop %v1989
    %v1998 = vmul.f32 %v1951, %v1990
    %v1999 = vmul.f32 %v1953, %v1991
    %v2000 = vmul.f32 %v1955, %v1992
    %v2001 = vmul.f32 %v1957, %v1993
    %v2002 = vmul.f32 %v1959, %v1994
    %v2003 = vmul.f32 %v1961, %v1995
    %v2004 = vmul.f32 %v1963, %v1996
    %v2005 = vmul.f32 %v1965, %v1997
    %v2006 = vpack.c.bf16 %v1999, %v1998
    %v2007 = vpack.c.bf16 %v2001, %v2000
    %v2008 = vpack.c.bf16 %v2003, %v2002
    %v2009 = vpack.c.bf16 %v2005, %v2004
    %v2011 = vsel %vm640, %v2006, 0
    %2013 = vmatprep.subr.bf16.mxu0 0
    %2014 = vmatpush1.bf16.msra.mxu0 %v1722
    %2015 = vmatprep.subr.bf16.mxu0 0
    %2016 = vmatpush1.bf16.msra.mxu0 0
    %2017 = vmatprep.subr.bf16.mxu0 0
    %2018 = vmatpush1.bf16.msra.mxu0 0
    %2019 = vmatprep.subr.bf16.mxu0 0
    %2020 = vmatpush1.bf16.msra.mxu0 0
    %2021 = vmatprep.subr.bf16.mxu0 0
    %2022 = vmatpush1.bf16.msra.mxu0 0
    %2023 = vmatprep.subr.bf16.mxu0 0
    %2024 = vmatpush1.bf16.msra.mxu0 0
    %2025 = vmatprep.subr.bf16.mxu0 0
    %2026 = vmatpush1.bf16.msra.mxu0 0
    %2027 = vmatprep.subr.bf16.mxu0 0
    %2028 = vmatpush1.bf16.msra.mxu0 0
    %2029 = vmatprep.subr.bf16.mxu0 0
    %2030 = vmatpush1.bf16.msra.mxu0 0
    %2031 = vmatprep.subr.bf16.mxu0 0
    %2032 = vmatpush1.bf16.msra.mxu0 0
    %2033 = vmatprep.subr.bf16.mxu0 0
    %2034 = vmatpush1.bf16.msra.mxu0 0
    %2035 = vmatprep.subr.bf16.mxu0 0
    %2036 = vmatpush1.bf16.msra.mxu0 0
    %2037 = vmatprep.subr.bf16.mxu0 0
    %2038 = vmatpush1.bf16.msra.mxu0 0
    %2039 = vmatprep.subr.bf16.mxu0 0
    %2040 = vmatpush1.bf16.msra.mxu0 0
    %2041 = vmatprep.subr.bf16.mxu0 0
    %2042 = vmatpush1.bf16.msra.mxu0 0
    %2043 = vmatprep.subr.bf16.mxu0 0
    %2044 = vmatpush1.bf16.msra.mxu0 0
    %2045 = vmatprep.mubr.bf16.mxu0 0
    %2046 = vmatmul.mubr.bf16.gmra.mrb[0].mxu0 %v2011
    %v2047 = vpop.f32.mrb[0].mxu0
    %v2048 = vadd.f32 0.0, %v2047
    %v2049 = vpop.f32.mrb[0].mxu0
    %v2050 = vpop.f32.mrb[0].mxu0
    %v2051 = vadd.f32 0.0, %v2050
    %v2052 = vpop.f32.mrb[0].mxu0
    %2053 = vdwg.mxu0
    %v2055 = vsel %vm640, %v2007, 0
    %2057 = vmatprep.subr.bf16.mxu0 0
    %2058 = vmatpush1.bf16.msra.mxu0 %v1723
    %2059 = vmatprep.subr.bf16.mxu0 0
    %2060 = vmatpush1.bf16.msra.mxu0 0
    %2061 = vmatprep.subr.bf16.mxu0 0
    %2062 = vmatpush1.bf16.msra.mxu0 0
    %2063 = vmatprep.subr.bf16.mxu0 0
    %2064 = vmatpush1.bf16.msra.mxu0 0
    %2065 = vmatprep.subr.bf16.mxu0 0
    %2066 = vmatpush1.bf16.msra.mxu0 0
    %2067 = vmatprep.subr.bf16.mxu0 0
    %2068 = vmatpush1.bf16.msra.mxu0 0
    %2069 = vmatprep.subr.bf16.mxu0 0
    %2070 = vmatpush1.bf16.msra.mxu0 0
    %2071 = vmatprep.subr.bf16.mxu0 0
    %2072 = vmatpush1.bf16.msra.mxu0 0
    %2073 = vmatprep.subr.bf16.mxu0 0
    %2074 = vmatpush1.bf16.msra.mxu0 0
    %2075 = vmatprep.subr.bf16.mxu0 0
    %2076 = vmatpush1.bf16.msra.mxu0 0
    %2077 = vmatprep.subr.bf16.mxu0 0
    %2078 = vmatpush1.bf16.msra.mxu0 0
    %2079 = vmatprep.subr.bf16.mxu0 0
    %2080 = vmatpush1.bf16.msra.mxu0 0
    %2081 = vmatprep.subr.bf16.mxu0 0
    %2082 = vmatpush1.bf16.msra.mxu0 0
    %2083 = vmatprep.subr.bf16.mxu0 0
    %2084 = vmatpush1.bf16.msra.mxu0 0
    %2085 = vmatprep.subr.bf16.mxu0 0
    %2086 = vmatpush1.bf16.msra.mxu0 0
    %2087 = vmatprep.subr.bf16.mxu0 0
    %2088 = vmatpush1.bf16.msra.mxu0 0
    %2089 = vmatprep.mubr.bf16.mxu0 0
    %2090 = vmatmul.mubr.bf16.gmra.mrb[0].mxu0 %v2055
    %v2091 = vpop.f32.mrb[0].mxu0
    %v2092 = vadd.f32 0.0, %v2091
    %v2093 = vpop.f32.mrb[0].mxu0
    %v2094 = vpop.f32.mrb[0].mxu0
    %v2095 = vadd.f32 0.0, %v2094
    %v2096 = vpop.f32.mrb[0].mxu0
    %2097 = vdwg.mxu0
    %v2099 = vsel %vm640, %v2008, 0
    %2101 = vmatprep.subr.bf16.mxu0 0
    %2102 = vmatpush1.bf16.msra.mxu0 %v1724
    %2103 = vmatprep.subr.bf16.mxu0 0
    %2104 = vmatpush1.bf16.msra.mxu0 0
    %2105 = vmatprep.subr.bf16.mxu0 0
    %2106 = vmatpush1.bf16.msra.mxu0 0
    %2107 = vmatprep.subr.bf16.mxu0 0
    %2108 = vmatpush1.bf16.msra.mxu0 0
    %2109 = vmatprep.subr.bf16.mxu0 0
    %2110 = vmatpush1.bf16.msra.mxu0 0
    %2111 = vmatprep.subr.bf16.mxu0 0
    %2112 = vmatpush1.bf16.msra.mxu0 0
    %2113 = vmatprep.subr.bf16.mxu0 0
    %2114 = vmatpush1.bf16.msra.mxu0 0
    %2115 = vmatprep.subr.bf16.mxu0 0
    %2116 = vmatpush1.bf16.msra.mxu0 0
    %2117 = vmatprep.subr.bf16.mxu0 0
    %2118 = vmatpush1.bf16.msra.mxu0 0
    %2119 = vmatprep.subr.bf16.mxu0 0
    %2120 = vmatpush1.bf16.msra.mxu0 0
    %2121 = vmatprep.subr.bf16.mxu0 0
    %2122 = vmatpush1.bf16.msra.mxu0 0
    %2123 = vmatprep.subr.bf16.mxu0 0
    %2124 = vmatpush1.bf16.msra.mxu0 0
    %2125 = vmatprep.subr.bf16.mxu0 0
    %2126 = vmatpush1.bf16.msra.mxu0 0
    %2127 = vmatprep.subr.bf16.mxu0 0
    %2128 = vmatpush1.bf16.msra.mxu0 0
    %2129 = vmatprep.subr.bf16.mxu0 0
    %2130 = vmatpush1.bf16.msra.mxu0 0
    %2131 = vmatprep.subr.bf16.mxu0 0
    %2132 = vmatpush1.bf16.msra.mxu0 0
    %2133 = vmatprep.mubr.bf16.mxu0 0
    %2134 = vmatmul.mubr.bf16.gmra.mrb[0].mxu0 %v2099
    %v2135 = vpop.f32.mrb[0].mxu0
    %v2136 = vadd.f32 0.0, %v2135
    %v2137 = vpop.f32.mrb[0].mxu0
    %v2138 = vpop.f32.mrb[0].mxu0
    %v2139 = vadd.f32 0.0, %v2138
    %v2140 = vpop.f32.mrb[0].mxu0
    %2141 = vdwg.mxu0
    %v2143 = vsel %vm640, %v2009, 0
    %2145 = vmatprep.subr.bf16.mxu0 0
    %2146 = vmatpush1.bf16.msra.mxu0 %v1725
    %2147 = vmatprep.subr.bf16.mxu0 0
    %2148 = vmatpush1.bf16.msra.mxu0 0
    %2149 = vmatprep.subr.bf16.mxu0 0
    %2150 = vmatpush1.bf16.msra.mxu0 0
    %2151 = vmatprep.subr.bf16.mxu0 0
    %2152 = vmatpush1.bf16.msra.mxu0 0
    %2153 = vmatprep.subr.bf16.mxu0 0
    %2154 = vmatpush1.bf16.msra.mxu0 0
    %2155 = vmatprep.subr.bf16.mxu0 0
    %2156 = vmatpush1.bf16.msra.mxu0 0
    %2157 = vmatprep.subr.bf16.mxu0 0
    %2158 = vmatpush1.bf16.msra.mxu0 0
    %2159 = vmatprep.subr.bf16.mxu0 0
    %2160 = vmatpush1.bf16.msra.mxu0 0
    %2161 = vmatprep.subr.bf16.mxu0 0
    %2162 = vmatpush1.bf16.msra.mxu0 0
    %2163 = vmatprep.subr.bf16.mxu0 0
    %2164 = vmatpush1.bf16.msra.mxu0 0
    %2165 = vmatprep.subr.bf16.mxu0 0
    %2166 = vmatpush1.bf16.msra.mxu0 0
    %2167 = vmatprep.subr.bf16.mxu0 0
    %2168 = vmatpush1.bf16.msra.mxu0 0
    %2169 = vmatprep.subr.bf16.mxu0 0
    %2170 = vmatpush1.bf16.msra.mxu0 0
    %2171 = vmatprep.subr.bf16.mxu0 0
    %2172 = vmatpush1.bf16.msra.mxu0 0
    %2173 = vmatprep.subr.bf16.mxu0 0
    %2174 = vmatpush1.bf16.msra.mxu0 0
    %2175 = vmatprep.subr.bf16.mxu0 0
    %2176 = vmatpush1.bf16.msra.mxu0 0
    %2177 = vmatprep.mubr.bf16.mxu0 0
    %2178 = vmatmul.mubr.bf16.gmra.mrb[0].mxu0 %v2143
    %v2179 = vpop.f32.mrb[0].mxu0
    %v2180 = vadd.f32 0.0, %v2179
    %v2181 = vpop.f32.mrb[0].mxu0
    %v2182 = vpop.f32.mrb[0].mxu0
    %v2183 = vadd.f32 0.0, %v2182
    %v2184 = vpop.f32.mrb[0].mxu0
    %2185 = vdwg.mxu0
    %v2186 = vcombine.low %v2048, %v2136
    %v2187 = vcombine.high %v2048, %v2136
    %v2189 = vunpack.c.l.s4 1983009808
    %v2190 = vunpack.c.0.s8 %v2189
    %v2191 = vlaneseq
    %v2192 = vshrl.u32 %v2191, 7
    %v2193 = vsub.s32 %v2190, %v2192
    %v2194 = vrot.slane %v2186, %v2193
    %v2196 = vunpack.c.l.s4 1983009808
    %v2197 = vunpack.c.0.s8 %v2196
    %v2198 = vlaneseq
    %v2199 = vshrl.u32 %v2198, 7
    %v2200 = vsub.s32 %v2197, %v2199
    %v2201 = vrot.slane %v2187, %v2200
    %v2202 = vcombine.low %v2092, %v2180
    %v2203 = vcombine.high %v2092, %v2180
    %v2205 = vunpack.c.l.s4 1983009808
    %v2206 = vunpack.c.0.s8 %v2205
    %v2207 = vlaneseq
    %v2208 = vshrl.u32 %v2207, 7
    %v2209 = vsub.s32 %v2206, %v2208
    %v2210 = vrot.slane %v2202, %v2209
    %v2212 = vunpack.c.l.s4 1983009808
    %v2213 = vunpack.c.0.s8 %v2212
    %v2214 = vlaneseq
    %v2215 = vshrl.u32 %v2214, 7
    %v2216 = vsub.s32 %v2213, %v2215
    %v2217 = vrot.slane %v2203, %v2216
    %v2218 = vcombine.low %v2194, %v2210
    %v2219 = vcombine.high %v2194, %v2210
    %v2221 = vunpack.c.l.s4 1934713408
    %v2222 = vunpack.c.0.s8 %v2221
    %v2223 = vlaneseq
    %v2224 = vshrl.u32 %v2223, 7
    %v2225 = vsub.s32 %v2222, %v2224
    %v2226 = vrot.slane %v2218, %v2225
    %v2228 = vunpack.c.l.s4 1934713408
    %v2229 = vunpack.c.0.s8 %v2228
    %v2230 = vlaneseq
    %v2231 = vshrl.u32 %v2230, 7
    %v2232 = vsub.s32 %v2229, %v2231
    %v2233 = vrot.slane %v2219, %v2232
    %v2234 = vcombine.low %v2201, %v2217
    %v2235 = vcombine.high %v2201, %v2217
    %v2237 = vunpack.c.l.s4 1934713408
    %v2238 = vunpack.c.0.s8 %v2237
    %v2239 = vlaneseq
    %v2240 = vshrl.u32 %v2239, 7
    %v2241 = vsub.s32 %v2238, %v2240
    %v2242 = vrot.slane %v2234, %v2241
    %v2244 = vunpack.c.l.s4 1934713408
    %v2245 = vunpack.c.0.s8 %v2244
    %v2246 = vlaneseq
    %v2247 = vshrl.u32 %v2246, 7
    %v2248 = vsub.s32 %v2245, %v2247
    %v2249 = vrot.slane %v2235, %v2248
    %v2250 = vcombine.high %v2226, 0.0
    %v2251 = vcombine.high %v2233, 0.0
    %v2252 = vcombine.high %v2242, 0.0
    %v2253 = vcombine.high %v2249, 0.0
    %v2254 = vcombine.low %v2051, %v2139
    %v2255 = vcombine.high %v2051, %v2139
    %v2257 = vunpack.c.l.s4 1983009808
    %v2258 = vunpack.c.0.s8 %v2257
    %v2259 = vlaneseq
    %v2260 = vshrl.u32 %v2259, 7
    %v2261 = vsub.s32 %v2258, %v2260
    %v2262 = vrot.slane %v2254, %v2261
    %v2264 = vunpack.c.l.s4 1983009808
    %v2265 = vunpack.c.0.s8 %v2264
    %v2266 = vlaneseq
    %v2267 = vshrl.u32 %v2266, 7
    %v2268 = vsub.s32 %v2265, %v2267
    %v2269 = vrot.slane %v2255, %v2268
    %v2270 = vcombine.low %v2095, %v2183
    %v2271 = vcombine.high %v2095, %v2183
    %v2273 = vunpack.c.l.s4 1983009808
    %v2274 = vunpack.c.0.s8 %v2273
    %v2275 = vlaneseq
    %v2276 = vshrl.u32 %v2275, 7
    %v2277 = vsub.s32 %v2274, %v2276
    %v2278 = vrot.slane %v2270, %v2277
    %v2280 = vunpack.c.l.s4 1983009808
    %v2281 = vunpack.c.0.s8 %v2280
    %v2282 = vlaneseq
    %v2283 = vshrl.u32 %v2282, 7
    %v2284 = vsub.s32 %v2281, %v2283
    %v2285 = vrot.slane %v2271, %v2284
    %v2286 = vcombine.low %v2262, %v2278
    %v2287 = vcombine.high %v2262, %v2278
    %v2289 = vunpack.c.l.s4 1934713408
    %v2290 = vunpack.c.0.s8 %v2289
    %v2291 = vlaneseq
    %v2292 = vshrl.u32 %v2291, 7
    %v2293 = vsub.s32 %v2290, %v2292
    %v2294 = vrot.slane %v2286, %v2293
    %v2296 = vunpack.c.l.s4 1934713408
    %v2297 = vunpack.c.0.s8 %v2296
    %v2298 = vlaneseq
    %v2299 = vshrl.u32 %v2298, 7
    %v2300 = vsub.s32 %v2297, %v2299
    %v2301 = vrot.slane %v2287, %v2300
    %v2302 = vcombine.low %v2269, %v2285
    %v2303 = vcombine.high %v2269, %v2285
    %v2305 = vunpack.c.l.s4 1934713408
    %v2306 = vunpack.c.0.s8 %v2305
    %v2307 = vlaneseq
    %v2308 = vshrl.u32 %v2307, 7
    %v2309 = vsub.s32 %v2306, %v2308
    %v2310 = vrot.slane %v2302, %v2309
    %v2312 = vunpack.c.l.s4 1934713408
    %v2313 = vunpack.c.0.s8 %v2312
    %v2314 = vlaneseq
    %v2315 = vshrl.u32 %v2314, 7
    %v2316 = vsub.s32 %v2313, %v2315
    %v2317 = vrot.slane %v2303, %v2316
    %v2318 = vcombine.high %v2294, 0.0
    %v2319 = vcombine.high %v2301, 0.0
    %v2320 = vcombine.high %v2310, 0.0
    %v2321 = vcombine.high %v2317, 0.0
    %v2322 = vcombine.low %v2226, %v2233
    %v2324 = vunpack.c.l.s4 1983009808
    %v2325 = vunpack.c.0.s8 %v2324
    %v2326 = vlaneseq
    %v2327 = vshrl.u32 %v2326, 7
    %v2328 = vsub.s32 %v2325, %v2327
    %v2329 = vrot.slane %v2322, %v2328
    %v2330 = vcombine.low %v2250, %v2251
    %v2332 = vunpack.c.l.s4 1983009808
    %v2333 = vunpack.c.0.s8 %v2332
    %v2334 = vlaneseq
    %v2335 = vshrl.u32 %v2334, 7
    %v2336 = vsub.s32 %v2333, %v2335
    %v2337 = vrot.slane %v2330, %v2336
    %v2338 = vcombine.low %v2242, %v2249
    %v2340 = vunpack.c.l.s4 1983009808
    %v2341 = vunpack.c.0.s8 %v2340
    %v2342 = vlaneseq
    %v2343 = vshrl.u32 %v2342, 7
    %v2344 = vsub.s32 %v2341, %v2343
    %v2345 = vrot.slane %v2338, %v2344
    %v2346 = vcombine.low %v2252, %v2253
    %v2348 = vunpack.c.l.s4 1983009808
    %v2349 = vunpack.c.0.s8 %v2348
    %v2350 = vlaneseq
    %v2351 = vshrl.u32 %v2350, 7
    %v2352 = vsub.s32 %v2349, %v2351
    %v2353 = vrot.slane %v2346, %v2352
    %v2354 = vcombine.low %v2329, %v2337
    %v2355 = vcombine.high %v2329, %v2337
    %v2357 = vunpack.c.l.s4 1934713408
    %v2358 = vunpack.c.0.s8 %v2357
    %v2359 = vlaneseq
    %v2360 = vshrl.u32 %v2359, 7
    %v2361 = vsub.s32 %v2358, %v2360
    %v2362 = vrot.slane %v2354, %v2361
    %v2364 = vunpack.c.l.s4 1934713408
    %v2365 = vunpack.c.0.s8 %v2364
    %v2366 = vlaneseq
    %v2367 = vshrl.u32 %v2366, 7
    %v2368 = vsub.s32 %v2365, %v2367
    %v2369 = vrot.slane %v2355, %v2368
    %v2370 = vcombine.low %v2345, %v2353
    %v2371 = vcombine.high %v2345, %v2353
    %v2373 = vunpack.c.l.s4 1934713408
    %v2374 = vunpack.c.0.s8 %v2373
    %v2375 = vlaneseq
    %v2376 = vshrl.u32 %v2375, 7
    %v2377 = vsub.s32 %v2374, %v2376
    %v2378 = vrot.slane %v2370, %v2377
    %v2380 = vunpack.c.l.s4 1934713408
    %v2381 = vunpack.c.0.s8 %v2380
    %v2382 = vlaneseq
    %v2383 = vshrl.u32 %v2382, 7
    %v2384 = vsub.s32 %v2381, %v2383
    %v2385 = vrot.slane %v2371, %v2384
    %v2386 = vcombine.low %v2362, %v2378
    %v2387 = vcombine.high %v2362, %v2378
    %v2388 = vcombine.low %v2369, %v2385
    %v2389 = vcombine.high %v2369, %v2385
    %v2390 = vcombine.low %v2294, %v2301
    %v2392 = vunpack.c.l.s4 1983009808
    %v2393 = vunpack.c.0.s8 %v2392
    %v2394 = vlaneseq
    %v2395 = vshrl.u32 %v2394, 7
    %v2396 = vsub.s32 %v2393, %v2395
    %v2397 = vrot.slane %v2390, %v2396
    %v2398 = vcombine.low %v2318, %v2319
    %v2400 = vunpack.c.l.s4 1983009808
    %v2401 = vunpack.c.0.s8 %v2400
    %v2402 = vlaneseq
    %v2403 = vshrl.u32 %v2402, 7
    %v2404 = vsub.s32 %v2401, %v2403
    %v2405 = vrot.slane %v2398, %v2404
    %v2406 = vcombine.low %v2310, %v2317
    %v2408 = vunpack.c.l.s4 1983009808
    %v2409 = vunpack.c.0.s8 %v2408
    %v2410 = vlaneseq
    %v2411 = vshrl.u32 %v2410, 7
    %v2412 = vsub.s32 %v2409, %v2411
    %v2413 = vrot.slane %v2406, %v2412
    %v2414 = vcombine.low %v2320, %v2321
    %v2416 = vunpack.c.l.s4 1983009808
    %v2417 = vunpack.c.0.s8 %v2416
    %v2418 = vlaneseq
    %v2419 = vshrl.u32 %v2418, 7
    %v2420 = vsub.s32 %v2417, %v2419
    %v2421 = vrot.slane %v2414, %v2420
    %v2422 = vcombine.low %v2397, %v2405
    %v2423 = vcombine.high %v2397, %v2405
    %v2425 = vunpack.c.l.s4 1934713408
    %v2426 = vunpack.c.0.s8 %v2425
    %v2427 = vlaneseq
    %v2428 = vshrl.u32 %v2427, 7
    %v2429 = vsub.s32 %v2426, %v2428
    %v2430 = vrot.slane %v2422, %v2429
    %v2432 = vunpack.c.l.s4 1934713408
    %v2433 = vunpack.c.0.s8 %v2432
    %v2434 = vlaneseq
    %v2435 = vshrl.u32 %v2434, 7
    %v2436 = vsub.s32 %v2433, %v2435
    %v2437 = vrot.slane %v2423, %v2436
    %v2438 = vcombine.low %v2413, %v2421
    %v2439 = vcombine.high %v2413, %v2421
    %v2441 = vunpack.c.l.s4 1934713408
    %v2442 = vunpack.c.0.s8 %v2441
    %v2443 = vlaneseq
    %v2444 = vshrl.u32 %v2443, 7
    %v2445 = vsub.s32 %v2442, %v2444
    %v2446 = vrot.slane %v2438, %v2445
    %v2448 = vunpack.c.l.s4 1934713408
    %v2449 = vunpack.c.0.s8 %v2448
    %v2450 = vlaneseq
    %v2451 = vshrl.u32 %v2450, 7
    %v2452 = vsub.s32 %v2449, %v2451
    %v2453 = vrot.slane %v2439, %v2452
    %v2454 = vcombine.low %v2430, %v2446
    %v2455 = vcombine.high %v2430, %v2446
    %v2456 = vcombine.low %v2437, %v2453
    %v2457 = vcombine.high %v2437, %v2453
    %2460 = vrot.lane.b32.xlu0 %v2387, 8
    %v2461 = vpop.permute.xlu0 %2460
    %2462 = vrot.lane.b32.xlu0 %v2455, 8
    %v2463 = vpop.permute.xlu0 %2462
    %2468 = vrot.lane.b32.xlu0 %v2388, 16
    %v2469 = vpop.permute.xlu0 %2468
    %2470 = vrot.lane.b32.xlu0 %v2456, 16
    %v2471 = vpop.permute.xlu0 %2470
    %2476 = vrot.lane.b32.xlu0 %v2389, 24
    %v2477 = vpop.permute.xlu0 %2476
    %2478 = vrot.lane.b32.xlu0 %v2457, 24
    %v2479 = vpop.permute.xlu0 %2478
    %v2482 = vsel %vm447, %v2386, %v2461
    %v2483 = vsel %vm447, %v2454, %v2463
    %v2484 = vsel %vm640, %v2482, %v2469
    %v2485 = vsel %vm640, %v2483, %v2471
    %v2486 = vsel %vm1209, %v2484, %v2477
    %v2487 = vsel %vm1209, %v2485, %v2479
    %v2488 = vpack.c.bf16 %v2487, %v2486
    %v2493 = vunpack.c.l.b16 %v1332
    %v2494 = vunpack.c.l.b16 %v1333
    %v2495 = vunpack.c.l.b16 %v1334
    %v2496 = vunpack.c.l.b16 %v1335
    %v2497 = vpack.c.b16 %v2494, %v2493
    %v2498 = vpack.c.b16 %v2496, %v2495
    %v2502 = vsel %vm1225, %v2488, 0
    %2504 = vmatprep.subr.bf16.mxu0 0
    %2505 = vmatpush1.bf16.msra.mxu0 %v2497
    %2506 = vmatprep.subr.bf16.mxu0 0
    %2507 = vmatpush1.bf16.msra.mxu0 %v2498
    %2508 = vmatprep.subr.bf16.mxu0 0
    %2509 = vmatpush1.bf16.msra.mxu0 0
    %2510 = vmatprep.subr.bf16.mxu0 0
    %2511 = vmatpush1.bf16.msra.mxu0 0
    %2512 = vmatprep.subr.bf16.mxu0 0
    %2513 = vmatpush1.bf16.msra.mxu0 0
    %2514 = vmatprep.subr.bf16.mxu0 0
    %2515 = vmatpush1.bf16.msra.mxu0 0
    %2516 = vmatprep.subr.bf16.mxu0 0
    %2517 = vmatpush1.bf16.msra.mxu0 0
    %2518 = vmatprep.subr.bf16.mxu0 0
    %2519 = vmatpush1.bf16.msra.mxu0 0
    %2520 = vmatprep.subr.bf16.mxu0 0
    %2521 = vmatpush1.bf16.msra.mxu0 0
    %2522 = vmatprep.subr.bf16.mxu0 0
    %2523 = vmatpush1.bf16.msra.mxu0 0
    %2524 = vmatprep.subr.bf16.mxu0 0
    %2525 = vmatpush1.bf16.msra.mxu0 0
    %2526 = vmatprep.subr.bf16.mxu0 0
    %2527 = vmatpush1.bf16.msra.mxu0 0
    %2528 = vmatprep.subr.bf16.mxu0 0
    %2529 = vmatpush1.bf16.msra.mxu0 0
    %2530 = vmatprep.subr.bf16.mxu0 0
    %2531 = vmatpush1.bf16.msra.mxu0 0
    %2532 = vmatprep.subr.bf16.mxu0 0
    %2533 = vmatpush1.bf16.msra.mxu0 0
    %2534 = vmatprep.subr.bf16.mxu0 0
    %2535 = vmatpush1.bf16.msra.mxu0 0
    %2536 = vmatprep.mubr.bf16.mxu0 0
    %2537 = vmatmul.mubr.bf16.gmra.mrb[0].mxu0 %v2502
    %v2538 = vpop.f32.mrb[0].mxu0
    %v2539 = vadd.f32 0.0, %v2538
    %v2540 = vpop.f32.mrb[0].mxu0
    %v2541 = vpop.f32.mrb[0].mxu0
    %v2542 = vadd.f32 0.0, %v2541
    %v2543 = vpop.f32.mrb[0].mxu0
    %2544 = vdwg.mxu0
    %v2545 = vmul.f32 %v2539, %v30
    %v2546 = vmul.f32 %v2542, %v31
    %v2547 = vadd.f32 %v2545, %v1312
    %v2548 = vadd.f32 %v2546, %v1313
    %2549 = vadd.xlane.f32.xlu0 %v2547
    %v2550 = vpop.xlane.xlu0 %2549
    %2551 = vadd.xlane.f32.xlu0 %v2548
    %v2552 = vpop.xlane.xlu0 %2551
    %v2553 = vmul.f32 %v2550, 0.03125
    %v2554 = vmul.f32 %v2552, 0.03125
    %v2555 = vsub.f32 %v2547, %v2553
    %v2556 = vsub.f32 %v2548, %v2554
    %v2557 = vmul.f32 %v2555, %v38
    %v2558 = vmul.f32 %v2556, %v38
    %v2559 = vmul.f32 %v2557, %v2557
    %v2560 = vmul.f32 %v2558, %v2558
    %2561 = vadd.xlane.f32.xlu0 %v2559
    %v2562 = vpop.xlane.xlu0 %2561
    %2563 = vadd.xlane.f32.xlu0 %v2560
    %v2564 = vpop.xlane.xlu0 %2563
    %v2565 = vmul.f32 %v2562, 0.03125
    %v2566 = vmul.f32 %v2564, 0.03125
    %v2567 = vadd.f32 %v2565, 1e-05
    %v2568 = vadd.f32 %v2566, 1e-05
    %v2569 = vrsqrt.pop %v2567
    %v2570 = vrsqrt.pop %v2568
    %v2571 = vmul.f32 %v2557, %v2569
    %v2572 = vmul.f32 %v2558, %v2570
    %v2574 = vlaneseq
    %v2575 = vshrl.u32 %v2574, 7
    %v2576 = vsub.s32 0, %v2575
    %v2577 = vrot.slane %v1337, %v2576
    %v2579 = vmul.f32 %v2571, %v2577
    %v2580 = vmul.f32 %v2572, %v2577
    %v2582 = vlaneseq
    %v2583 = vshrl.u32 %v2582, 7
    %v2584 = vsub.s32 0, %v2583
    %v2585 = vrot.slane %v1339, %v2584
    %v2587 = vadd.f32 %v2579, %v2585
    %v2588 = vadd.f32 %v2580, %v2585
    %2589 = vst [vmem:[#allocation2] sm:$0xff] %v2587
    %2590 = vst [vmem:[#allocation2 + $0x8] sm:$0xff] %v2588
    // Predicated region
    $region30: #{tpu_custom_call.1} parent=1 // pred_check
      _
    $region31: #{tpu_custom_call.1} parent=1 // pred_check_branch
      %2592 = sbr.rel (0) target = $region33
    $region32: #{tpu_custom_call.1} parent=1 // pred_region
      %s2594 = ssub.s32 256, 256
      %2595 = vsyncadd [#allocation3], %s2594
      %s2596 = sshll.u32 [#allocation2], 4
      %s2597 = int_to_ptr.vmem [resolvable:$true] %s2596
      %2602 = dma.vmem_to_hbm [thread:$0]  %s2597, 256, %s7, [#allocation3], 128, 128, 8
    $region33: #{tpu_custom_call.1} parent=1 // pred_fallthru
      _
    // Predicated region
    $region34: #{tpu_custom_call.1} parent=1 // pred_check
      _
    $region35: #{tpu_custom_call.1} parent=1 // pred_check_branch
      %2604 = sbr.rel (0) target = $region37
    $region36: #{tpu_custom_call.1} parent=1 // pred_region
      %2605 = dma.done [#allocation3], 256
    $region37: #{tpu_custom_call.1} parent=1 // pred_fallthru
      _
    %2606 = vsyncpa [#allocation3], 1

</llo_original>
